<compile_context>
chip_gen: v7x
topology: tpu7x:2x2x1
jax: 0.10.0
libtpu: 0.0.40
codegen_flags: <defaults>
</compile_context>

<pallas_src>
import jax
import jax.numpy as jnp
import numpy as np
from jax.experimental import pallas as pl
from jax.experimental.pallas import tpu as pltpu


# ----------------------------- helpers (plain JAX glue) -----------------------------

def _round_up(v, m):
    return ((v + m - 1) // m) * m


def _vmem_need_bytes(tn, k, cin_p, cp):
    """Rough per-grid-step VMEM footprint (double-buffered blocks + f32 temps)."""
    return (2 * k * tn * cin_p * 2      # xj block (bf16), double buffered
            + 2 * tn * cin_p * 2        # x block  (bf16), double buffered
            + 2 * tn * cp * 4           # out block (f32), double buffered
            + k * tn * cp * 4           # fused-dot f32 intermediate (K*TN, Cp)
            + 2 * tn * cp * 4           # base / max temporaries (f32)
            + 4 * cin_p * cp * 2)       # the two weight tiles (bf16), double buffered


def _choose_tile_n(n, batch, k, cin_p, cp, *, cap=1024, vmem_budget=40 * 1024 * 1024):
    """Pick TN (multiple of 16): as large as the VMEM budget / cap allow, but keep
    >= ~4 grid steps so both v7x TensorCores get work and the pipeline has depth."""
    tn = min(_round_up(n, 16), cap)
    while tn > 16 and _vmem_need_bytes(tn, k, cin_p, cp) > vmem_budget:
        tn -= 16
    # prefer >= 4 grid steps (v7x has 2 TCs; pipeline needs depth) ...
    while tn > 128 and batch * pl.cdiv(n, tn) < 4:
        tn = _round_up(max(tn // 2, 16), 16)
    # ... and at least 2 steps whenever n allows it.
    while tn > 16 and batch * pl.cdiv(n, tn) < 2:
        tn = _round_up(max(tn // 2, 16), 16)
    # re-balance so padding N up to a multiple of TN is minimal.
    steps = pl.cdiv(n, tn)
    tn = min(tn, _round_up(pl.cdiv(n, steps), 16))
    return max(tn, 16)


def _knn_idx(x4, k):
    """Mirror of DenseDilatedKnnGraph(k, dilation=1, stochastic=False).

    x4: (B, C, N, 1) -> nn_idx (B, N, K) int32 (edge_index[0]); edge_index[1]
    is the trivial self index and is not materialized.
    The O(N^2*C) distance matmul runs in bf16 with f32 accumulation.
    """
    xf = x4[:, :, :, 0]                                           # (B, C, N)
    norm = jnp.maximum(jnp.linalg.norm(xf, axis=1, keepdims=True), 1e-12)
    xn = xf / norm                                                # F.normalize(dim=1)
    xt = jnp.transpose(xn, (0, 2, 1))                             # (B, N, C) f32
    xt16 = xt.astype(jnp.bfloat16)
    inner = -2.0 * jnp.einsum('bnc,bmc->bnm', xt16, xt16,
                              preferred_element_type=jnp.float32)
    sq = jnp.sum(xt * xt, axis=-1, keepdims=True)                 # (B, N, 1) f32
    dist = sq + inner + jnp.transpose(sq, (0, 2, 1))              # (B, N, N)
    _, nn_idx = jax.lax.top_k(-dist, k)                           # (B, N, K)
    return nn_idx.astype(jnp.int32)


def batched_index_select(x, idx):
    """x: (B, C, N, 1), idx: (B, N, K) -> (B, C, N, K). Mirrors gcn_lib."""
    B, C, N, _ = x.shape
    K = idx.shape[-1]
    xf = x[:, :, :, 0]
    idx_b = jnp.broadcast_to(idx.reshape(B, 1, N * K), (B, C, N * K))
    return jnp.take_along_axis(xf, idx_b, axis=2).reshape(B, C, N, K)


# ----------------------------------- Pallas kernel ----------------------------------

def _edgeconv_kernel(x_ref, xj_ref, wd_ref, w2_ref, o_ref):
    # x_ref : (1, TN, Cin_p)      bf16 center features (x_i == x); channel Cin is
    #                             a constant 1.0 that carries the bias row of wd.
    # xj_ref: (1, K, TN, Cin_p)   bf16 gathered neighbor features, channels-last.
    # wd_ref: (Cin_p, Cp)  bf16   = W1 - W2, with bias folded into the ones-channel row.
    # w2_ref: (Cin_p, Cp)  bf16   = W2 (zero row at the ones-channel / pad rows).
    # o_ref : (1, TN, Cp)  f32
    k, tn, cin = xj_ref.shape[1], xj_ref.shape[2], xj_ref.shape[3]
    cp = o_ref.shape[2]

    # x_i term + bias (constant over K), one MXU call, f32 accumulation.
    base = jnp.dot(x_ref[0], wd_ref[...], preferred_element_type=jnp.float32)   # (TN, Cp)

    # Single fused neighbor matmul over all K*TN rows (leading-dim merge is free),
    # then max over K.  Intermediate is (K*TN, Cp) f32 in VMEM (budgeted for).
    xj = xj_ref[0].reshape(k * tn, cin)                                          # (K*TN, Cin_p)
    zj = jnp.dot(xj, w2_ref[...], preferred_element_type=jnp.float32)            # (K*TN, Cp)
    m = jnp.max(zj.reshape(k, tn, cp), axis=0)                                   # (TN, Cp)

    # x-term/bias added AFTER the K-max (exact: constant over K); ReLU last
    # (exact: ReLU is monotone, so it commutes with the max).
    o_ref[0] = jnp.maximum(base + m, 0.0)


def dy_graph_conv2d(x, weight, bias, k=9, *, tile_n_cap=1024):
    """
    x:      (B, Cin, H, W) float32
    weight: (Cout, 2*Cin, 1, 1) float32   (PyTorch Conv2d layout)
    bias:   (Cout,) float32
    returns (B, Cout, H, W) float32
    """
    B, Cin, H, W = x.shape
    N = H * W
    Cout = weight.shape[0]
    x4 = x.reshape(B, Cin, N, 1)

    # --- dynamic KNN graph (plain JAX; top_k has no clean Pallas equivalent) ---
    nn_idx = _knn_idx(x4, k)                                      # (B, N, K)

    # --- channels-last bf16 features, padded Cin + a constant-one bias channel ---
    Cin_p = _round_up(Cin + 1, 8)                                 # sublane-dense, >=1 pad ch.
    x_nc = jnp.transpose(x4[:, :, :, 0], (0, 2, 1))               # (B, N, Cin) f32
    x_pad = jnp.zeros((B, N, Cin_p), jnp.bfloat16)
    x_pad = x_pad.at[:, :, :Cin].set(x_nc.astype(jnp.bfloat16))
    x_pad = x_pad.at[:, :, Cin].set(jnp.bfloat16(1.0))            # bias channel

    # --- exact weight split: conv(cat([x_i, x_j - x_i])) = x_i@(W1-W2) + x_j@W2 + b ---
    w2d = weight[:, :, 0, 0].astype(jnp.float32)                  # (Cout, 2Cin)
    w1 = w2d[:, :Cin].T                                           # (Cin, Cout)
    w2 = w2d[:, Cin:].T                                           # (Cin, Cout)
    wd = w1 - w2

    # --- pad Cout to a lane-dense multiple of 128 (unmasked vst), slice after ---
    Cp = _round_up(Cout, 128)
    wd_p = jnp.zeros((Cin_p, Cp), jnp.float32).at[:Cin, :Cout].set(wd)
    wd_p = wd_p.at[Cin, :Cout].set(bias.astype(jnp.float32))      # bias folded into wd
    w2_p = jnp.zeros((Cin_p, Cp), jnp.float32).at[:Cin, :Cout].set(w2)
    wd_p = wd_p.astype(jnp.bfloat16)
    w2_p = w2_p.astype(jnp.bfloat16)

    # --- tile size from an explicit VMEM budget; pad N to a multiple of TN ---
    TN = _choose_tile_n(N, B, k, Cin_p, Cp, cap=tile_n_cap)
    N_p = _round_up(N, TN)
    if N_p != N:
        x_pad = jnp.pad(x_pad, ((0, 0), (0, N_p - N), (0, 0)))
        nn_idx = jnp.pad(nn_idx, ((0, 0), (0, N_p - N), (0, 0)))  # pad rows gather row 0

    # --- neighbor gather (XLA, bf16) directly in the (B, K, N_p, Cin_p) layout ---
    # TODO(synk): move this gather in-kernel (scalar-prefetched nn_idx + VMEM-resident
    #             x slab) once an efficient Mosaic vector gather is available.
    idx_kn = jnp.transpose(nn_idx, (0, 2, 1)).reshape(B, k * N_p)          # (B, K*N_p)
    xj = jnp.take_along_axis(x_pad, idx_kn[:, :, None], axis=1)            # (B, K*N_p, Cin_p)
    xj = xj.reshape(B, k, N_p, Cin_p)                                      # (B, K, N_p, Cin_p)

    grid = (B, N_p // TN)
    need = _vmem_need_bytes(TN, k, Cin_p, Cp)
    vmem_limit = int(min(60 * 1024 * 1024, max(32 * 1024 * 1024, 2 * need)))

    out_nc = pl.pallas_call(
        _edgeconv_kernel,
        out_shape=jax.ShapeDtypeStruct((B, N_p, Cp), jnp.float32),
        grid=grid,
        in_specs=[
            pl.BlockSpec((1, TN, Cin_p), lambda b, n: (b, n, 0)),          # x (center)
            pl.BlockSpec((1, k, TN, Cin_p), lambda b, n: (b, 0, n, 0)),    # x_j gathered
            pl.BlockSpec((Cin_p, Cp), lambda b, n: (0, 0)),                # W1 - W2 (+bias row)
            pl.BlockSpec((Cin_p, Cp), lambda b, n: (0, 0)),                # W2
        ],
        out_specs=pl.BlockSpec((1, TN, Cp), lambda b, n: (b, n, 0)),
        compiler_params=pltpu.CompilerParams(
            dimension_semantics=("parallel", "parallel"),
            vmem_limit_bytes=vmem_limit),
    )(x_pad, xj, wd_p, w2_p)

    out = out_nc[:, :N, :Cout]                                    # (B, N, Cout)
    out = jnp.transpose(out, (0, 2, 1))                           # (B, Cout, N)
    return out.reshape(B, Cout, H, W)


# ------------------------------- pure-JAX reference ---------------------------------

def dy_graph_conv2d_ref(x, weight, bias, k=9):
    """Literal mirror of the PyTorch DyGraphConv2d forward (conv='edge', r=1), f32."""
    B, C, H, W = x.shape
    N = H * W
    x4 = x.reshape(B, C, N, 1)
    nn_idx = _knn_idx(x4, k)                                       # edge_index[0]
    center_idx = jnp.broadcast_to(
        jnp.arange(N, dtype=jnp.int32)[None, :, None], (B, N, k))  # edge_index[1]
    x_i = batched_index_select(x4, center_idx)                     # (B, C, N, K)
    x_j = batched_index_select(x4, nn_idx)                         # (B, C, N, K)
    feat = jnp.concatenate([x_i, x_j - x_i], axis=1)               # (B, 2C, N, K)
    w2d = weight[:, :, 0, 0]                                       # (Cout, 2C)
    y = jnp.einsum('bcnk,oc->bonk', feat, w2d) + bias[None, :, None, None]
    y = jnp.maximum(y, 0.0)                                        # BasicConv act='relu'
    y = jnp.max(y, axis=-1, keepdims=True)                         # (B, Cout, N, 1)
    return y.reshape(B, -1, H, W)


# --------------------------------------- main ---------------------------------------

if __name__ == "__main__":
    B, Cin, Cout, H, W = 2, 4, 8, 16, 16
    K = 9   # DyGraphConv2d default kernel_size

    key = jax.random.PRNGKey(0)
    kx, kw, kb = jax.random.split(key, 3)

    x = jax.random.normal(kx, (B, Cin, H, W), dtype=jnp.float32)
    weight = jax.random.normal(kw, (Cout, 2 * Cin, 1, 1), dtype=jnp.float32) * 0.1
    bias = jax.random.normal(kb, (Cout,), dtype=jnp.float32) * 0.1

    out = jax.block_until_ready(dy_graph_conv2d(x, weight, bias, K))
    ref = jax.block_until_ready(dy_graph_conv2d_ref(x, weight, bias, K))

    # bf16 MXU inputs (f32 accumulation) -> loosened tolerance vs the f32 reference.
    np.testing.assert_allclose(np.asarray(out), np.asarray(ref), rtol=2e-2, atol=2e-2)
    assert out.shape == (B, Cout, H, W)

    print("KERNEL_OK")
</pallas_src>

<mosaic_0001>
module attributes {stable_mosaic.version = 11 : i64} {
  func.func @_edgeconv_kernel(%arg0: i32, %arg1: i32, %arg2: memref<1x128x8xbf16, #tpu.memory_space<vmem>>, %arg3: memref<1x9x128x8xbf16, #tpu.memory_space<vmem>>, %arg4: memref<8x128xbf16, #tpu.memory_space<vmem>>, %arg5: memref<8x128xbf16, #tpu.memory_space<vmem>>, %arg6: memref<1x128x128xf32, #tpu.memory_space<vmem>>) attributes {dimension_semantics = [#tpu.dimension_semantics<parallel>, #tpu.dimension_semantics<parallel>], iteration_bounds = array<i64: 2, 2>, scalar_prefetch = 0 : i64, scratch_operands = 0 : i64, tpu.core_type = #tpu.core_type<tc>, window_params = [{transform_indices = @transform_0, window_bounds = array<i64: 1, 128, 8>}, {transform_indices = @transform_1, window_bounds = array<i64: 1, 9, 128, 8>}, {pipeline_mode = #tpu.pipeline_mode<synchronous>, transform_indices = @transform_2, window_bounds = array<i64: 8, 128>}, {pipeline_mode = #tpu.pipeline_mode<synchronous>, transform_indices = @transform_3, window_bounds = array<i64: 8, 128>}, {transform_indices = @transform_4, window_bounds = array<i64: 1, 128, 128>}]} {
    %c0 = arith.constant 0 : index
    %c0_0 = arith.constant 0 : index
    %c0_1 = arith.constant 0 : index
    %0 = vector.load %arg2[%c0, %c0_0, %c0_1] : memref<1x128x8xbf16, #tpu.memory_space<vmem>>, vector<1x128x8xbf16>
    %1 = vector.shape_cast %0 : vector<1x128x8xbf16> to vector<128x8xbf16>
    %c0_2 = arith.constant 0 : index
    %c0_3 = arith.constant 0 : index
    %2 = vector.load %arg4[%c0_2, %c0_3] : memref<8x128xbf16, #tpu.memory_space<vmem>>, vector<8x128xbf16>
    %cst = arith.constant dense<0.000000e+00> : vector<128x128xf32>
    %3 = tpu.matmul %1, %2, %cst {dimension_numbers = #tpu.dot_dimension_numbers<[1], [0], [0], [1], [0, 0, 1, 1], [], []>} : vector<128x8xbf16>, vector<8x128xbf16>, vector<128x128xf32> -> vector<128x128xf32>
    %c0_4 = arith.constant 0 : index
    %c0_5 = arith.constant 0 : index
    %c0_6 = arith.constant 0 : index
    %c0_7 = arith.constant 0 : index
    %4 = vector.load %arg3[%c0_4, %c0_5, %c0_6, %c0_7] : memref<1x9x128x8xbf16, #tpu.memory_space<vmem>>, vector<1x9x128x8xbf16>
    %5 = vector.shape_cast %4 : vector<1x9x128x8xbf16> to vector<9x128x8xbf16>
    %6 = vector.shape_cast %5 : vector<9x128x8xbf16> to vector<1152x8xbf16>
    %c0_8 = arith.constant 0 : index
    %c0_9 = arith.constant 0 : index
    %7 = vector.load %arg5[%c0_8, %c0_9] : memref<8x128xbf16, #tpu.memory_space<vmem>>, vector<8x128xbf16>
    %cst_10 = arith.constant dense<0.000000e+00> : vector<1152x128xf32>
    %8 = tpu.matmul %6, %7, %cst_10 {dimension_numbers = #tpu.dot_dimension_numbers<[1], [0], [0], [1], [0, 0, 1, 1], [], []>} : vector<1152x8xbf16>, vector<8x128xbf16>, vector<1152x128xf32> -> vector<1152x128xf32>
    %9 = vector.shape_cast %8 : vector<1152x128xf32> to vector<9x128x128xf32>
    %cst_11 = arith.constant dense<0xFF800000> : vector<128x128xf32>
    %10 = vector.multi_reduction <maximumf>, %9, %cst_11 [0] : vector<9x128x128xf32> to vector<128x128xf32>
    %11 = arith.addf %3, %10 : vector<128x128xf32>
    %cst_12 = arith.constant 0.000000e+00 : f32
    %12 = vector.broadcast %cst_12 : f32 to vector<128x128xf32>
    %13 = arith.maximumf %11, %12 : vector<128x128xf32>
    %c0_13 = arith.constant 0 : index
    %c0_14 = arith.constant 0 : index
    %c0_15 = arith.constant 0 : index
    %14 = vector.load %arg6[%c0_13, %c0_14, %c0_15] : memref<1x128x128xf32, #tpu.memory_space<vmem>>, vector<1x128x128xf32>
    %15 = vector.shape_cast %14 : vector<1x128x128xf32> to vector<128x128xf32>
    %16 = vector.shape_cast %13 : vector<128x128xf32> to vector<1x128x128xf32>
    tpu.vector_store %arg6[%c0_13, %c0_14, %c0_15], %16 {strides = array<i32>} : memref<1x128x128xf32, #tpu.memory_space<vmem>>, vector<1x128x128xf32>,
    return
  }
  func.func @transform_0(%arg0: i32, %arg1: i32) -> (i32, i32, i32) {
    %c0_i32 = arith.constant 0 : i32
    %c0_i32_0 = arith.constant 0 : i32
    return %arg0, %arg1, %c0_i32 : i32, i32, i32
  }
  func.func @transform_1(%arg0: i32, %arg1: i32) -> (i32, i32, i32, i32) {
    %c0_i32 = arith.constant 0 : i32
    %c0_i32_0 = arith.constant 0 : i32
    %c0_i32_1 = arith.constant 0 : i32
    return %arg0, %c0_i32, %arg1, %c0_i32_0 : i32, i32, i32, i32
  }
  func.func @transform_2(%arg0: i32, %arg1: i32) -> (i32, i32) {
    %c0_i32 = arith.constant 0 : i32
    %c0_i32_0 = arith.constant 0 : i32
    %c0_i32_1 = arith.constant 0 : i32
    return %c0_i32, %c0_i32_0 : i32, i32
  }
  func.func @transform_3(%arg0: i32, %arg1: i32) -> (i32, i32) {
    %c0_i32 = arith.constant 0 : i32
    %c0_i32_0 = arith.constant 0 : i32
    %c0_i32_1 = arith.constant 0 : i32
    return %c0_i32, %c0_i32_0 : i32, i32
  }
  func.func @transform_4(%arg0: i32, %arg1: i32) -> (i32, i32, i32) {
    %c0_i32 = arith.constant 0 : i32
    %c0_i32_0 = arith.constant 0 : i32
    return %arg0, %arg1, %c0_i32 : i32, i32, i32
  }
}

</mosaic_0001>

<llo_original>
// kernel: tpu_custom_call.1
$region0: #{tpu_custom_call.1}
  #allocation0 [shape = 'u32[]', space=smem, size = 0x4, offset = 0x4, fixed_abs, tag = 'smem constant byte address 0x4 - core index']
  #allocation1 [shape = 'u32[144,128]{1,0:T(1,128)}', space=vmem, size = 0x12000, scoped, tag = 'internal scratch']
  %s0 = inlined_call_operand.vmem [shape: bf16[2,256,8], index: 0, kind: input, shape index: {}]
  %s1 = inlined_call_operand.vmem [shape: bf16[2,9,256,8], index: 1, kind: input, shape index: {}]
  %s2 = inlined_call_operand.vmem [shape: bf16[8,128], index: 2, kind: input, shape index: {}]
  %s3 = inlined_call_operand.vmem [shape: bf16[8,128], index: 3, kind: input, shape index: {}]
  %s4 = inlined_call_operand.hbm [shape: f32[2,256,128], index: 4, kind: output, shape index: {}]
  %s5 = sld [smem:[#allocation0]]
  $region90: #{tpu_custom_call.1} parent=0
    _
  %s7 = ssub.s32 1, %s5
  %s8 = scalar_select 0, %s7, %s5
  $region1: #{tpu_custom_call.1} parent=0
    #allocation2 [shape = 'u8[589824]{0}', space=vmem, size = 0x90000, scoped, tag = 'input window, operand 1']
    #allocation3 [shape = 'u8[131072]{0}', space=vmem, size = 0x20000, scoped, tag = 'output window, operand 0']
    #allocation4 [shape = 's32[2]{0}', space=sflag, size = 0x8, scoped, tag = 'scoped memory for tpu_custom_call.1']
    %9 = vsyncpa [#allocation4], 0
    %s10 = scalar_lea.sflag [#allocation4], 1
    %11 = vsyncpa %s10, 0
    loop: start=0, step=1, limit=6
    $region2: #{tpu_custom_call.1} parent=1 // loop_pre_header
      _
    $region3: #{tpu_custom_call.1} parent=1 // loop_header
      %s13 = sphi 0, %s17
      %p14 = scmp.ge.s32.totalorder %s13, 6
      %s20 = sphi 0, %s32
      %s21 = sphi 0, %s28
      %s22 = sphi 0, %s20
      %s23 = sphi 0, %s21
      %s24 = sphi 0, %s22
      %s25 = sphi 0, %s23
      %s37 = sphi 0, %s39
      %s40 = sphi 0, %s37
      %s41 = sphi 0, %s40
      %s57 = sphi 0, %s41
      %s65 = sphi 0, %s67
      %s68 = sphi 0, %s65
      %s69 = sphi 0, %s68
      %s85 = sphi 0, %s69
      %s89 = sphi 0, %s89
      %s91 = sphi 0, %s89
      %s92 = sphi 0, %s91
      %s106 = sphi 0, %s92
      %s110 = sphi 0, %s110
      %s112 = sphi 0, %s110
      %s113 = sphi 0, %s112
      %s127 = sphi 0, %s113
      %s135 = sphi 0, %s137
      %s138 = sphi 0, %s135
      %s139 = sphi 0, %s138
      %s155 = sphi 0, %s139
    $region4: #{tpu_custom_call.1} parent=1 // loop_header_branch
      %16 = sbr.rel (%p14) target = $region8
    $region5: #{tpu_custom_call.1} parent=1 // loop_body
      %s18 = ssub.s32 %s13, 1
      %s19 = ssub.s32 %s13, 2
      %s26 = sadd.s32 1, %s21
      %p27 = scmp.ge.s32.totalorder %s26, 2
      %s28 = scalar_select %p27, 0, %s26
      %s29 = sadd.s32 1, %s20
      %s30 = scalar_select %p27, %s29, %s20
      %p31 = scmp.ge.s32.totalorder %s30, 2
      %s32 = scalar_select %p31, 0, %s30
      %s33 = ssub.s32 %s20, %s32
      %s34 = ssub.s32 %s21, %s28
      %s35 = sor.u32 %s33, %s34
      %p36 = scmp.eq.s32.totalorder %s35, 0
      %s38 = sadd.s32 %s37, 1
      %s39 = scalar_select %p36, %s37, %s38
      %p42 = pneg %p36
      %p43 = scmp.eq.s32.totalorder %s13, 3
      %p44 = por %p42, %p43
      %p45 = scmp.ne.s32.totalorder %s37, %s40
      %p46 = scmp.eq.s32.totalorder %s13, 0
      %p47 = por %p45, %p46
      %p48 = scmp.ne.s32.totalorder %s37, %s40
      %p49 = scmp.eq.s32.totalorder %s18, 3
      %p50 = por %p48, %p49
      %p51 = scmp.ne.s32.totalorder %s40, %s41
      %p52 = scmp.eq.s32.totalorder %s18, 0
      %p53 = por %p51, %p52
      %p54 = scmp.ne.s32.totalorder %s40, %s41
      %p55 = scmp.eq.s32.totalorder %s19, 3
      %p56 = por %p54, %p55
      %p58 = scmp.ne.s32.totalorder %s41, %s57
      %p59 = scmp.eq.s32.totalorder %s19, 0
      %p60 = por %p58, %p59
      %s61 = ssub.s32 %s20, %s32
      %s62 = ssub.s32 %s21, %s28
      %s63 = sor.u32 %s61, %s62
      %p64 = scmp.eq.s32.totalorder %s63, 0
      %s66 = sadd.s32 %s65, 1
      %s67 = scalar_select %p64, %s65, %s66
      %p70 = pneg %p64
      %p71 = scmp.eq.s32.totalorder %s13, 3
      %p72 = por %p70, %p71
      %p73 = scmp.ne.s32.totalorder %s65, %s68
      %p74 = scmp.eq.s32.totalorder %s13, 0
      %p75 = por %p73, %p74
      %p76 = scmp.ne.s32.totalorder %s65, %s68
      %p77 = scmp.eq.s32.totalorder %s18, 3
      %p78 = por %p76, %p77
      %p79 = scmp.ne.s32.totalorder %s68, %s69
      %p80 = scmp.eq.s32.totalorder %s18, 0
      %p81 = por %p79, %p80
      %p82 = scmp.ne.s32.totalorder %s68, %s69
      %p83 = scmp.eq.s32.totalorder %s19, 3
      %p84 = por %p82, %p83
      %p86 = scmp.ne.s32.totalorder %s69, %s85
      %p87 = scmp.eq.s32.totalorder %s19, 0
      %p88 = por %p86, %p87
      %s90 = sadd.s32 %s89, 1
      %p93 = scmp.eq.s32.totalorder %s13, 3
      %p94 = scmp.ne.s32.totalorder %s89, %s91
      %p95 = scmp.eq.s32.totalorder %s13, 0
      %p96 = por %p94, %p95
      %p97 = scmp.ne.s32.totalorder %s89, %s91
      %p98 = scmp.eq.s32.totalorder %s18, 3
      %p99 = por %p97, %p98
      %p100 = scmp.ne.s32.totalorder %s91, %s92
      %p101 = scmp.eq.s32.totalorder %s18, 0
      %p102 = por %p100, %p101
      %p103 = scmp.ne.s32.totalorder %s91, %s92
      %p104 = scmp.eq.s32.totalorder %s19, 3
      %p105 = por %p103, %p104
      %p107 = scmp.ne.s32.totalorder %s92, %s106
      %p108 = scmp.eq.s32.totalorder %s19, 0
      %p109 = por %p107, %p108
      %s111 = sadd.s32 %s110, 1
      %p114 = scmp.eq.s32.totalorder %s13, 3
      %p115 = scmp.ne.s32.totalorder %s110, %s112
      %p116 = scmp.eq.s32.totalorder %s13, 0
      %p117 = por %p115, %p116
      %p118 = scmp.ne.s32.totalorder %s110, %s112
      %p119 = scmp.eq.s32.totalorder %s18, 3
      %p120 = por %p118, %p119
      %p121 = scmp.ne.s32.totalorder %s112, %s113
      %p122 = scmp.eq.s32.totalorder %s18, 0
      %p123 = por %p121, %p122
      %p124 = scmp.ne.s32.totalorder %s112, %s113
      %p125 = scmp.eq.s32.totalorder %s19, 3
      %p126 = por %p124, %p125
      %p128 = scmp.ne.s32.totalorder %s113, %s127
      %p129 = scmp.eq.s32.totalorder %s19, 0
      %p130 = por %p128, %p129
      %s131 = ssub.s32 %s20, %s32
      %s132 = ssub.s32 %s21, %s28
      %s133 = sor.u32 %s131, %s132
      %p134 = scmp.eq.s32.totalorder %s133, 0
      %s136 = sadd.s32 %s135, 1
      %s137 = scalar_select %p134, %s135, %s136
      %p140 = pneg %p134
      %p141 = scmp.eq.s32.totalorder %s13, 3
      %p142 = por %p140, %p141
      %p143 = scmp.ne.s32.totalorder %s135, %s138
      %p144 = scmp.eq.s32.totalorder %s13, 0
      %p145 = por %p143, %p144
      %p146 = scmp.ne.s32.totalorder %s135, %s138
      %p147 = scmp.eq.s32.totalorder %s18, 3
      %p148 = por %p146, %p147
      %p149 = scmp.ne.s32.totalorder %s138, %s139
      %p150 = scmp.eq.s32.totalorder %s18, 0
      %p151 = por %p149, %p150
      %p152 = scmp.ne.s32.totalorder %s138, %s139
      %p153 = scmp.eq.s32.totalorder %s19, 3
      %p154 = por %p152, %p153
      %p156 = scmp.ne.s32.totalorder %s139, %s155
      %p157 = scmp.eq.s32.totalorder %s19, 0
      %p158 = por %p156, %p157
      %p159 = scmp.le.s32.totalorder 1, %s13
      %p160 = scmp.lt.s32.totalorder %s13, 5
      %p161 = pnand %p159, %p160
      %p162 = pneg %p161
      // Predicated region
      $region9: #{tpu_custom_call.1} parent=5 // pred_check
        _
      $region10: #{tpu_custom_call.1} parent=5 // pred_check_branch
        %164 = sbr.rel (%p161) target = $region12
      $region11: #{tpu_custom_call.1} parent=5 // pred_region
        %s165 = ssub.s32 %s13, 1
        // Predicated region
        $region13: #{tpu_custom_call.1} parent=11 // pred_check
          %p166 = pneg %p102
        $region14: #{tpu_custom_call.1} parent=11 // pred_check_branch
          %168 = sbr.rel (%p166) target = $region16
        $region15: #{tpu_custom_call.1} parent=11 // pred_region
          _
        $region16: #{tpu_custom_call.1} parent=11 // pred_fallthru
          _
        // Predicated region
        $region17: #{tpu_custom_call.1} parent=11 // pred_check
          %p169 = pneg %p123
        $region18: #{tpu_custom_call.1} parent=11 // pred_check_branch
          %171 = sbr.rel (%p169) target = $region20
        $region19: #{tpu_custom_call.1} parent=11 // pred_region
          _
        $region20: #{tpu_custom_call.1} parent=11 // pred_fallthru
          _
      $region12: #{tpu_custom_call.1} parent=5 // pred_fallthru
        _
      %p172 = scmp.lt.s32.totalorder %s13, 4
      // Predicated region
      $region21: #{tpu_custom_call.1} parent=5 // pred_check
        %p173 = pneg %p172
      $region22: #{tpu_custom_call.1} parent=5 // pred_check_branch
        %175 = sbr.rel (%p173) target = $region24
      $region23: #{tpu_custom_call.1} parent=5 // pred_region
        // Predicated region
        $region25: #{tpu_custom_call.1} parent=23 // pred_check
          %p176 = pneg %p47
        $region26: #{tpu_custom_call.1} parent=23 // pred_check_branch
          %178 = sbr.rel (%p176) target = $region28
        $region27: #{tpu_custom_call.1} parent=23 // pred_region
          %s179 = smul.u32 16, %s21
          %p180 = scmp.lt.s32.totalorder %s20, 1
          %s181 = scalar_select %p180, %s20, 1
          %p182 = scmp.lt.s32.totalorder %s179, 31
          %s183 = scalar_select %p182, %s179, 31
          %s184 = smul.addr %s181, 32
          %s185 = sadd.s32 %s183, %s184
          %s186 = smul.addr %s185, 4
          %s187 = scalar_lea.vmem %s0, %s186
          %s188 = smul.u32 16, %s21
        $region28: #{tpu_custom_call.1} parent=23 // pred_fallthru
          _
        // Predicated region
        $region29: #{tpu_custom_call.1} parent=23 // pred_check
          %p189 = pneg %p75
        $region30: #{tpu_custom_call.1} parent=23 // pred_check_branch
          %191 = sbr.rel (%p189) target = $region32
        $region31: #{tpu_custom_call.1} parent=23 // pred_region
          %s192 = sand.u32 %s65, 1
          %s193 = sand.u32 %s65, 1
          %s194 = smul.addr %s193, 576
          %s195 = scalar_lea.vmem [#allocation2], %s194
          %s196 = smul.u32 16, %s21
          %s197 = smul.addr %s20, 288
          %s198 = sadd.s32 %s196, %s197
          %s199 = smul.addr %s198, 4
          %s200 = scalar_lea.vmem %s1, %s199
          // Predicated region
          $region33: #{tpu_custom_call.1} parent=31 // pred_check
            _
          $region34: #{tpu_custom_call.1} parent=31 // pred_check_branch
            %202 = sbr.rel (0) target = $region36
          $region35: #{tpu_custom_call.1} parent=31 // pred_region
            // Predicated region
            $region37: #{tpu_custom_call.1} parent=35 // pred_check
              _
            $region38: #{tpu_custom_call.1} parent=35 // pred_check_branch
              %204 = sbr.rel target = $region40
            $region39: #{tpu_custom_call.1} parent=35 // pred_region
              // Predicated region
              $region52: #{tpu_custom_call.1} parent=39 // pred_check
                _
              $region53: #{tpu_custom_call.1} parent=39 // pred_check_branch
                %505 = sbr.rel (0) target = $region55
              $region54: #{tpu_custom_call.1} parent=39 // pred_region
                loop: start=0, step=1, limit=1
                $region56: #{tpu_custom_call.1} parent=54 // loop_pre_header
                  _
                $region57: #{tpu_custom_call.1} parent=54 // loop_header
                  %s507 = sphi 0, %s511
                  %p508 = scmp.ge.s32.totalorder %s507, 1
                  %s512 = sphi %s200, %s200
                  %s513 = sphi %s195, %s195
                $region58: #{tpu_custom_call.1} parent=54 // loop_header_branch
                  %510 = sbr.rel (%p508) target = $region62
                $region59: #{tpu_custom_call.1} parent=54 // loop_body
                  _
                $region60: #{tpu_custom_call.1} parent=54 // loop_footer
                  %s511 = sadd.s32 1, %s507
                $region61: #{tpu_custom_call.1} parent=54 // loop_footer_branch
                  %506 = sbr.rel target = $region57
                $region62: #{tpu_custom_call.1} parent=54 // loop_exit
                  _
                loop: start=0, step=1, limit=1
                $region63: #{tpu_custom_call.1} parent=54 // loop_pre_header
                  _
                $region64: #{tpu_custom_call.1} parent=54 // loop_header
                  %s516 = sphi 0, %s520
                  %p517 = scmp.ge.s32.totalorder %s516, 1
                  %s521 = sphi %s200, %s200
                  %s522 = sphi %s195, %s195
                $region65: #{tpu_custom_call.1} parent=54 // loop_header_branch
                  %519 = sbr.rel (%p517) target = $region69
                $region66: #{tpu_custom_call.1} parent=54 // loop_body
                  %v523 = vld [vmem:[%s521] sm:$0xf]
                  %524 = vst [vmem:[%s522] sm:$0xf] %v523
                  %v525 = vld [vmem:[%s521 + $0x4] sm:$0xf]
                  %526 = vst [vmem:[%s522 + $0x4] sm:$0xf] %v525
                  %v527 = vld [vmem:[%s521 + $0x8] sm:$0xf]
                  %528 = vst [vmem:[%s522 + $0x8] sm:$0xf] %v527
                  %v529 = vld [vmem:[%s521 + $0xc] sm:$0xf]
                  %530 = vst [vmem:[%s522 + $0xc] sm:$0xf] %v529
                  %v531 = vld [vmem:[%s521 + $0x10] sm:$0xf]
                  %532 = vst [vmem:[%s522 + $0x10] sm:$0xf] %v531
                  %v533 = vld [vmem:[%s521 + $0x14] sm:$0xf]
                  %534 = vst [vmem:[%s522 + $0x14] sm:$0xf] %v533
                  %v535 = vld [vmem:[%s521 + $0x18] sm:$0xf]
                  %536 = vst [vmem:[%s522 + $0x18] sm:$0xf] %v535
                  %v537 = vld [vmem:[%s521 + $0x1c] sm:$0xf]
                  %538 = vst [vmem:[%s522 + $0x1c] sm:$0xf] %v537
                  %v539 = vld [vmem:[%s521 + $0x20] sm:$0xf]
                  %540 = vst [vmem:[%s522 + $0x20] sm:$0xf] %v539
                  %v541 = vld [vmem:[%s521 + $0x24] sm:$0xf]
                  %542 = vst [vmem:[%s522 + $0x24] sm:$0xf] %v541
                  %v543 = vld [vmem:[%s521 + $0x28] sm:$0xf]
                  %544 = vst [vmem:[%s522 + $0x28] sm:$0xf] %v543
                  %v545 = vld [vmem:[%s521 + $0x2c] sm:$0xf]
                  %546 = vst [vmem:[%s522 + $0x2c] sm:$0xf] %v545
                  %v547 = vld [vmem:[%s521 + $0x30] sm:$0xf]
                  %548 = vst [vmem:[%s522 + $0x30] sm:$0xf] %v547
                  %v549 = vld [vmem:[%s521 + $0x34] sm:$0xf]
                  %550 = vst [vmem:[%s522 + $0x34] sm:$0xf] %v549
                  %v551 = vld [vmem:[%s521 + $0x38] sm:$0xf]
                  %552 = vst [vmem:[%s522 + $0x38] sm:$0xf] %v551
                  %v553 = vld [vmem:[%s521 + $0x3c] sm:$0xf]
                  %554 = vst [vmem:[%s522 + $0x3c] sm:$0xf] %v553
                  %v555 = vld [vmem:[%s521 + $0x80] sm:$0xf]
                  %556 = vst [vmem:[%s522 + $0x40] sm:$0xf] %v555
                  %v557 = vld [vmem:[%s521 + $0x84] sm:$0xf]
                  %558 = vst [vmem:[%s522 + $0x44] sm:$0xf] %v557
                  %v559 = vld [vmem:[%s521 + $0x88] sm:$0xf]
                  %560 = vst [vmem:[%s522 + $0x48] sm:$0xf] %v559
                  %v561 = vld [vmem:[%s521 + $0x8c] sm:$0xf]
                  %562 = vst [vmem:[%s522 + $0x4c] sm:$0xf] %v561
                  %v563 = vld [vmem:[%s521 + $0x90] sm:$0xf]
                  %564 = vst [vmem:[%s522 + $0x50] sm:$0xf] %v563
                  %v565 = vld [vmem:[%s521 + $0x94] sm:$0xf]
                  %566 = vst [vmem:[%s522 + $0x54] sm:$0xf] %v565
                  %v567 = vld [vmem:[%s521 + $0x98] sm:$0xf]
                  %568 = vst [vmem:[%s522 + $0x58] sm:$0xf] %v567
                  %v569 = vld [vmem:[%s521 + $0x9c] sm:$0xf]
                  %570 = vst [vmem:[%s522 + $0x5c] sm:$0xf] %v569
                  %v571 = vld [vmem:[%s521 + $0xa0] sm:$0xf]
                  %572 = vst [vmem:[%s522 + $0x60] sm:$0xf] %v571
                  %v573 = vld [vmem:[%s521 + $0xa4] sm:$0xf]
                  %574 = vst [vmem:[%s522 + $0x64] sm:$0xf] %v573
                  %v575 = vld [vmem:[%s521 + $0xa8] sm:$0xf]
                  %576 = vst [vmem:[%s522 + $0x68] sm:$0xf] %v575
                  %v577 = vld [vmem:[%s521 + $0xac] sm:$0xf]
                  %578 = vst [vmem:[%s522 + $0x6c] sm:$0xf] %v577
                  %v579 = vld [vmem:[%s521 + $0xb0] sm:$0xf]
                  %580 = vst [vmem:[%s522 + $0x70] sm:$0xf] %v579
                  %v581 = vld [vmem:[%s521 + $0xb4] sm:$0xf]
                  %582 = vst [vmem:[%s522 + $0x74] sm:$0xf] %v581
                  %v583 = vld [vmem:[%s521 + $0xb8] sm:$0xf]
                  %584 = vst [vmem:[%s522 + $0x78] sm:$0xf] %v583
                  %v585 = vld [vmem:[%s521 + $0xbc] sm:$0xf]
                  %586 = vst [vmem:[%s522 + $0x7c] sm:$0xf] %v585
                  %v587 = vld [vmem:[%s521 + $0x100] sm:$0xf]
                  %588 = vst [vmem:[%s522 + $0x80] sm:$0xf] %v587
                  %v589 = vld [vmem:[%s521 + $0x104] sm:$0xf]
                  %590 = vst [vmem:[%s522 + $0x84] sm:$0xf] %v589
                  %v591 = vld [vmem:[%s521 + $0x108] sm:$0xf]
                  %592 = vst [vmem:[%s522 + $0x88] sm:$0xf] %v591
                  %v593 = vld [vmem:[%s521 + $0x10c] sm:$0xf]
                  %594 = vst [vmem:[%s522 + $0x8c] sm:$0xf] %v593
                  %v595 = vld [vmem:[%s521 + $0x110] sm:$0xf]
                  %596 = vst [vmem:[%s522 + $0x90] sm:$0xf] %v595
                  %v597 = vld [vmem:[%s521 + $0x114] sm:$0xf]
                  %598 = vst [vmem:[%s522 + $0x94] sm:$0xf] %v597
                  %v599 = vld [vmem:[%s521 + $0x118] sm:$0xf]
                  %600 = vst [vmem:[%s522 + $0x98] sm:$0xf] %v599
                  %v601 = vld [vmem:[%s521 + $0x11c] sm:$0xf]
                  %602 = vst [vmem:[%s522 + $0x9c] sm:$0xf] %v601
                  %v603 = vld [vmem:[%s521 + $0x120] sm:$0xf]
                  %604 = vst [vmem:[%s522 + $0xa0] sm:$0xf] %v603
                  %v605 = vld [vmem:[%s521 + $0x124] sm:$0xf]
                  %606 = vst [vmem:[%s522 + $0xa4] sm:$0xf] %v605
                  %v607 = vld [vmem:[%s521 + $0x128] sm:$0xf]
                  %608 = vst [vmem:[%s522 + $0xa8] sm:$0xf] %v607
                  %v609 = vld [vmem:[%s521 + $0x12c] sm:$0xf]
                  %610 = vst [vmem:[%s522 + $0xac] sm:$0xf] %v609
                  %v611 = vld [vmem:[%s521 + $0x130] sm:$0xf]
                  %612 = vst [vmem:[%s522 + $0xb0] sm:$0xf] %v611
                  %v613 = vld [vmem:[%s521 + $0x134] sm:$0xf]
                  %614 = vst [vmem:[%s522 + $0xb4] sm:$0xf] %v613
                  %v615 = vld [vmem:[%s521 + $0x138] sm:$0xf]
                  %616 = vst [vmem:[%s522 + $0xb8] sm:$0xf] %v615
                  %v617 = vld [vmem:[%s521 + $0x13c] sm:$0xf]
                  %618 = vst [vmem:[%s522 + $0xbc] sm:$0xf] %v617
                  %v619 = vld [vmem:[%s521 + $0x180] sm:$0xf]
                  %620 = vst [vmem:[%s522 + $0xc0] sm:$0xf] %v619
                  %v621 = vld [vmem:[%s521 + $0x184] sm:$0xf]
                  %622 = vst [vmem:[%s522 + $0xc4] sm:$0xf] %v621
                  %v623 = vld [vmem:[%s521 + $0x188] sm:$0xf]
                  %624 = vst [vmem:[%s522 + $0xc8] sm:$0xf] %v623
                  %v625 = vld [vmem:[%s521 + $0x18c] sm:$0xf]
                  %626 = vst [vmem:[%s522 + $0xcc] sm:$0xf] %v625
                  %v627 = vld [vmem:[%s521 + $0x190] sm:$0xf]
                  %628 = vst [vmem:[%s522 + $0xd0] sm:$0xf] %v627
                  %v629 = vld [vmem:[%s521 + $0x194] sm:$0xf]
                  %630 = vst [vmem:[%s522 + $0xd4] sm:$0xf] %v629
                  %v631 = vld [vmem:[%s521 + $0x198] sm:$0xf]
                  %632 = vst [vmem:[%s522 + $0xd8] sm:$0xf] %v631
                  %v633 = vld [vmem:[%s521 + $0x19c] sm:$0xf]
                  %634 = vst [vmem:[%s522 + $0xdc] sm:$0xf] %v633
                  %v635 = vld [vmem:[%s521 + $0x1a0] sm:$0xf]
                  %636 = vst [vmem:[%s522 + $0xe0] sm:$0xf] %v635
                  %v637 = vld [vmem:[%s521 + $0x1a4] sm:$0xf]
                  %638 = vst [vmem:[%s522 + $0xe4] sm:$0xf] %v637
                  %v639 = vld [vmem:[%s521 + $0x1a8] sm:$0xf]
                  %640 = vst [vmem:[%s522 + $0xe8] sm:$0xf] %v639
                  %v641 = vld [vmem:[%s521 + $0x1ac] sm:$0xf]
                  %642 = vst [vmem:[%s522 + $0xec] sm:$0xf] %v641
                  %v643 = vld [vmem:[%s521 + $0x1b0] sm:$0xf]
                  %644 = vst [vmem:[%s522 + $0xf0] sm:$0xf] %v643
                  %v645 = vld [vmem:[%s521 + $0x1b4] sm:$0xf]
                  %646 = vst [vmem:[%s522 + $0xf4] sm:$0xf] %v645
                  %v647 = vld [vmem:[%s521 + $0x1b8] sm:$0xf]
                  %648 = vst [vmem:[%s522 + $0xf8] sm:$0xf] %v647
                  %v649 = vld [vmem:[%s521 + $0x1bc] sm:$0xf]
                  %650 = vst [vmem:[%s522 + $0xfc] sm:$0xf] %v649
                  %v651 = vld [vmem:[%s521 + $0x200] sm:$0xf]
                  %652 = vst [vmem:[%s522 + $0x100] sm:$0xf] %v651
                  %v653 = vld [vmem:[%s521 + $0x204] sm:$0xf]
                  %654 = vst [vmem:[%s522 + $0x104] sm:$0xf] %v653
                  %v655 = vld [vmem:[%s521 + $0x208] sm:$0xf]
                  %656 = vst [vmem:[%s522 + $0x108] sm:$0xf] %v655
                  %v657 = vld [vmem:[%s521 + $0x20c] sm:$0xf]
                  %658 = vst [vmem:[%s522 + $0x10c] sm:$0xf] %v657
                  %v659 = vld [vmem:[%s521 + $0x210] sm:$0xf]
                  %660 = vst [vmem:[%s522 + $0x110] sm:$0xf] %v659
                  %v661 = vld [vmem:[%s521 + $0x214] sm:$0xf]
                  %662 = vst [vmem:[%s522 + $0x114] sm:$0xf] %v661
                  %v663 = vld [vmem:[%s521 + $0x218] sm:$0xf]
                  %664 = vst [vmem:[%s522 + $0x118] sm:$0xf] %v663
                  %v665 = vld [vmem:[%s521 + $0x21c] sm:$0xf]
                  %666 = vst [vmem:[%s522 + $0x11c] sm:$0xf] %v665
                  %v667 = vld [vmem:[%s521 + $0x220] sm:$0xf]
                  %668 = vst [vmem:[%s522 + $0x120] sm:$0xf] %v667
                  %v669 = vld [vmem:[%s521 + $0x224] sm:$0xf]
                  %670 = vst [vmem:[%s522 + $0x124] sm:$0xf] %v669
                  %v671 = vld [vmem:[%s521 + $0x228] sm:$0xf]
                  %672 = vst [vmem:[%s522 + $0x128] sm:$0xf] %v671
                  %v673 = vld [vmem:[%s521 + $0x22c] sm:$0xf]
                  %674 = vst [vmem:[%s522 + $0x12c] sm:$0xf] %v673
                  %v675 = vld [vmem:[%s521 + $0x230] sm:$0xf]
                  %676 = vst [vmem:[%s522 + $0x130] sm:$0xf] %v675
                  %v677 = vld [vmem:[%s521 + $0x234] sm:$0xf]
                  %678 = vst [vmem:[%s522 + $0x134] sm:$0xf] %v677
                  %v679 = vld [vmem:[%s521 + $0x238] sm:$0xf]
                  %680 = vst [vmem:[%s522 + $0x138] sm:$0xf] %v679
                  %v681 = vld [vmem:[%s521 + $0x23c] sm:$0xf]
                  %682 = vst [vmem:[%s522 + $0x13c] sm:$0xf] %v681
                  %v683 = vld [vmem:[%s521 + $0x280] sm:$0xf]
                  %684 = vst [vmem:[%s522 + $0x140] sm:$0xf] %v683
                  %v685 = vld [vmem:[%s521 + $0x284] sm:$0xf]
                  %686 = vst [vmem:[%s522 + $0x144] sm:$0xf] %v685
                  %v687 = vld [vmem:[%s521 + $0x288] sm:$0xf]
                  %688 = vst [vmem:[%s522 + $0x148] sm:$0xf] %v687
                  %v689 = vld [vmem:[%s521 + $0x28c] sm:$0xf]
                  %690 = vst [vmem:[%s522 + $0x14c] sm:$0xf] %v689
                  %v691 = vld [vmem:[%s521 + $0x290] sm:$0xf]
                  %692 = vst [vmem:[%s522 + $0x150] sm:$0xf] %v691
                  %v693 = vld [vmem:[%s521 + $0x294] sm:$0xf]
                  %694 = vst [vmem:[%s522 + $0x154] sm:$0xf] %v693
                  %v695 = vld [vmem:[%s521 + $0x298] sm:$0xf]
                  %696 = vst [vmem:[%s522 + $0x158] sm:$0xf] %v695
                  %v697 = vld [vmem:[%s521 + $0x29c] sm:$0xf]
                  %698 = vst [vmem:[%s522 + $0x15c] sm:$0xf] %v697
                  %v699 = vld [vmem:[%s521 + $0x2a0] sm:$0xf]
                  %700 = vst [vmem:[%s522 + $0x160] sm:$0xf] %v699
                  %v701 = vld [vmem:[%s521 + $0x2a4] sm:$0xf]
                  %702 = vst [vmem:[%s522 + $0x164] sm:$0xf] %v701
                  %v703 = vld [vmem:[%s521 + $0x2a8] sm:$0xf]
                  %704 = vst [vmem:[%s522 + $0x168] sm:$0xf] %v703
                  %v705 = vld [vmem:[%s521 + $0x2ac] sm:$0xf]
                  %706 = vst [vmem:[%s522 + $0x16c] sm:$0xf] %v705
                  %v707 = vld [vmem:[%s521 + $0x2b0] sm:$0xf]
                  %708 = vst [vmem:[%s522 + $0x170] sm:$0xf] %v707
                  %v709 = vld [vmem:[%s521 + $0x2b4] sm:$0xf]
                  %710 = vst [vmem:[%s522 + $0x174] sm:$0xf] %v709
                  %v711 = vld [vmem:[%s521 + $0x2b8] sm:$0xf]
                  %712 = vst [vmem:[%s522 + $0x178] sm:$0xf] %v711
                  %v713 = vld [vmem:[%s521 + $0x2bc] sm:$0xf]
                  %714 = vst [vmem:[%s522 + $0x17c] sm:$0xf] %v713
                  %v715 = vld [vmem:[%s521 + $0x300] sm:$0xf]
                  %716 = vst [vmem:[%s522 + $0x180] sm:$0xf] %v715
                  %v717 = vld [vmem:[%s521 + $0x304] sm:$0xf]
                  %718 = vst [vmem:[%s522 + $0x184] sm:$0xf] %v717
                  %v719 = vld [vmem:[%s521 + $0x308] sm:$0xf]
                  %720 = vst [vmem:[%s522 + $0x188] sm:$0xf] %v719
                  %v721 = vld [vmem:[%s521 + $0x30c] sm:$0xf]
                  %722 = vst [vmem:[%s522 + $0x18c] sm:$0xf] %v721
                  %v723 = vld [vmem:[%s521 + $0x310] sm:$0xf]
                  %724 = vst [vmem:[%s522 + $0x190] sm:$0xf] %v723
                  %v725 = vld [vmem:[%s521 + $0x314] sm:$0xf]
                  %726 = vst [vmem:[%s522 + $0x194] sm:$0xf] %v725
                  %v727 = vld [vmem:[%s521 + $0x318] sm:$0xf]
                  %728 = vst [vmem:[%s522 + $0x198] sm:$0xf] %v727
                  %v729 = vld [vmem:[%s521 + $0x31c] sm:$0xf]
                  %730 = vst [vmem:[%s522 + $0x19c] sm:$0xf] %v729
                  %v731 = vld [vmem:[%s521 + $0x320] sm:$0xf]
                  %732 = vst [vmem:[%s522 + $0x1a0] sm:$0xf] %v731
                  %v733 = vld [vmem:[%s521 + $0x324] sm:$0xf]
                  %734 = vst [vmem:[%s522 + $0x1a4] sm:$0xf] %v733
                  %v735 = vld [vmem:[%s521 + $0x328] sm:$0xf]
                  %736 = vst [vmem:[%s522 + $0x1a8] sm:$0xf] %v735
                  %v737 = vld [vmem:[%s521 + $0x32c] sm:$0xf]
                  %738 = vst [vmem:[%s522 + $0x1ac] sm:$0xf] %v737
                  %v739 = vld [vmem:[%s521 + $0x330] sm:$0xf]
                  %740 = vst [vmem:[%s522 + $0x1b0] sm:$0xf] %v739
                  %v741 = vld [vmem:[%s521 + $0x334] sm:$0xf]
                  %742 = vst [vmem:[%s522 + $0x1b4] sm:$0xf] %v741
                  %v743 = vld [vmem:[%s521 + $0x338] sm:$0xf]
                  %744 = vst [vmem:[%s522 + $0x1b8] sm:$0xf] %v743
                  %v745 = vld [vmem:[%s521 + $0x33c] sm:$0xf]
                  %746 = vst [vmem:[%s522 + $0x1bc] sm:$0xf] %v745
                  %v747 = vld [vmem:[%s521 + $0x380] sm:$0xf]
                  %748 = vst [vmem:[%s522 + $0x1c0] sm:$0xf] %v747
                  %v749 = vld [vmem:[%s521 + $0x384] sm:$0xf]
                  %750 = vst [vmem:[%s522 + $0x1c4] sm:$0xf] %v749
                  %v751 = vld [vmem:[%s521 + $0x388] sm:$0xf]
                  %752 = vst [vmem:[%s522 + $0x1c8] sm:$0xf] %v751
                  %v753 = vld [vmem:[%s521 + $0x38c] sm:$0xf]
                  %754 = vst [vmem:[%s522 + $0x1cc] sm:$0xf] %v753
                  %v755 = vld [vmem:[%s521 + $0x390] sm:$0xf]
                  %756 = vst [vmem:[%s522 + $0x1d0] sm:$0xf] %v755
                  %v757 = vld [vmem:[%s521 + $0x394] sm:$0xf]
                  %758 = vst [vmem:[%s522 + $0x1d4] sm:$0xf] %v757
                  %v759 = vld [vmem:[%s521 + $0x398] sm:$0xf]
                  %760 = vst [vmem:[%s522 + $0x1d8] sm:$0xf] %v759
                  %v761 = vld [vmem:[%s521 + $0x39c] sm:$0xf]
                  %762 = vst [vmem:[%s522 + $0x1dc] sm:$0xf] %v761
                  %v763 = vld [vmem:[%s521 + $0x3a0] sm:$0xf]
                  %764 = vst [vmem:[%s522 + $0x1e0] sm:$0xf] %v763
                  %v765 = vld [vmem:[%s521 + $0x3a4] sm:$0xf]
                  %766 = vst [vmem:[%s522 + $0x1e4] sm:$0xf] %v765
                  %v767 = vld [vmem:[%s521 + $0x3a8] sm:$0xf]
                  %768 = vst [vmem:[%s522 + $0x1e8] sm:$0xf] %v767
                  %v769 = vld [vmem:[%s521 + $0x3ac] sm:$0xf]
                  %770 = vst [vmem:[%s522 + $0x1ec] sm:$0xf] %v769
                  %v771 = vld [vmem:[%s521 + $0x3b0] sm:$0xf]
                  %772 = vst [vmem:[%s522 + $0x1f0] sm:$0xf] %v771
                  %v773 = vld [vmem:[%s521 + $0x3b4] sm:$0xf]
                  %774 = vst [vmem:[%s522 + $0x1f4] sm:$0xf] %v773
                  %v775 = vld [vmem:[%s521 + $0x3b8] sm:$0xf]
                  %776 = vst [vmem:[%s522 + $0x1f8] sm:$0xf] %v775
                  %v777 = vld [vmem:[%s521 + $0x3bc] sm:$0xf]
                  %778 = vst [vmem:[%s522 + $0x1fc] sm:$0xf] %v777
                  %v779 = vld [vmem:[%s521 + $0x400] sm:$0xf]
                  %780 = vst [vmem:[%s522 + $0x200] sm:$0xf] %v779
                  %v781 = vld [vmem:[%s521 + $0x404] sm:$0xf]
                  %782 = vst [vmem:[%s522 + $0x204] sm:$0xf] %v781
                  %v783 = vld [vmem:[%s521 + $0x408] sm:$0xf]
                  %784 = vst [vmem:[%s522 + $0x208] sm:$0xf] %v783
                  %v785 = vld [vmem:[%s521 + $0x40c] sm:$0xf]
                  %786 = vst [vmem:[%s522 + $0x20c] sm:$0xf] %v785
                  %v787 = vld [vmem:[%s521 + $0x410] sm:$0xf]
                  %788 = vst [vmem:[%s522 + $0x210] sm:$0xf] %v787
                  %v789 = vld [vmem:[%s521 + $0x414] sm:$0xf]
                  %790 = vst [vmem:[%s522 + $0x214] sm:$0xf] %v789
                  %v791 = vld [vmem:[%s521 + $0x418] sm:$0xf]
                  %792 = vst [vmem:[%s522 + $0x218] sm:$0xf] %v791
                  %v793 = vld [vmem:[%s521 + $0x41c] sm:$0xf]
                  %794 = vst [vmem:[%s522 + $0x21c] sm:$0xf] %v793
                  %v795 = vld [vmem:[%s521 + $0x420] sm:$0xf]
                  %796 = vst [vmem:[%s522 + $0x220] sm:$0xf] %v795
                  %v797 = vld [vmem:[%s521 + $0x424] sm:$0xf]
                  %798 = vst [vmem:[%s522 + $0x224] sm:$0xf] %v797
                  %v799 = vld [vmem:[%s521 + $0x428] sm:$0xf]
                  %800 = vst [vmem:[%s522 + $0x228] sm:$0xf] %v799
                  %v801 = vld [vmem:[%s521 + $0x42c] sm:$0xf]
                  %802 = vst [vmem:[%s522 + $0x22c] sm:$0xf] %v801
                  %v803 = vld [vmem:[%s521 + $0x430] sm:$0xf]
                  %804 = vst [vmem:[%s522 + $0x230] sm:$0xf] %v803
                  %v805 = vld [vmem:[%s521 + $0x434] sm:$0xf]
                  %806 = vst [vmem:[%s522 + $0x234] sm:$0xf] %v805
                  %v807 = vld [vmem:[%s521 + $0x438] sm:$0xf]
                  %808 = vst [vmem:[%s522 + $0x238] sm:$0xf] %v807
                  %v809 = vld [vmem:[%s521 + $0x43c] sm:$0xf]
                  %810 = vst [vmem:[%s522 + $0x23c] sm:$0xf] %v809
                $region67: #{tpu_custom_call.1} parent=54 // loop_footer
                  %s520 = sadd.s32 1, %s516
                $region68: #{tpu_custom_call.1} parent=54 // loop_footer_branch
                  %515 = sbr.rel target = $region64
                $region69: #{tpu_custom_call.1} parent=54 // loop_exit
                  _
              $region55: #{tpu_custom_call.1} parent=39 // pred_fallthru
                _
            $region40: #{tpu_custom_call.1} parent=35 // pred_fallthru
              _
            // Predicated region
            $region41: #{tpu_custom_call.1} parent=35 // pred_check
              _
            $region42: #{tpu_custom_call.1} parent=35 // pred_check_branch
              %206 = sbr.rel (0) target = $region44
            $region43: #{tpu_custom_call.1} parent=35 // pred_region
              loop: start=0, step=1, limit=1
              $region45: #{tpu_custom_call.1} parent=43 // loop_pre_header
                _
              $region46: #{tpu_custom_call.1} parent=43 // loop_header
                %s209 = sphi 0, %s213
                %p210 = scmp.ge.s32.totalorder %s209, 1
                %s214 = sphi %s200, %s200
                %s215 = sphi %s195, %s195
              $region47: #{tpu_custom_call.1} parent=43 // loop_header_branch
                %212 = sbr.rel (%p210) target = $region51
              $region48: #{tpu_custom_call.1} parent=43 // loop_body
                %v216 = vld [vmem:[%s214] sm:$0xf]
                %217 = vst [vmem:[%s215] sm:$0xf] %v216
                %v218 = vld [vmem:[%s214 + $0x4] sm:$0xf]
                %219 = vst [vmem:[%s215 + $0x4] sm:$0xf] %v218
                %v220 = vld [vmem:[%s214 + $0x8] sm:$0xf]
                %221 = vst [vmem:[%s215 + $0x8] sm:$0xf] %v220
                %v222 = vld [vmem:[%s214 + $0xc] sm:$0xf]
                %223 = vst [vmem:[%s215 + $0xc] sm:$0xf] %v222
                %v224 = vld [vmem:[%s214 + $0x10] sm:$0xf]
                %225 = vst [vmem:[%s215 + $0x10] sm:$0xf] %v224
                %v226 = vld [vmem:[%s214 + $0x14] sm:$0xf]
                %227 = vst [vmem:[%s215 + $0x14] sm:$0xf] %v226
                %v228 = vld [vmem:[%s214 + $0x18] sm:$0xf]
                %229 = vst [vmem:[%s215 + $0x18] sm:$0xf] %v228
                %v230 = vld [vmem:[%s214 + $0x1c] sm:$0xf]
                %231 = vst [vmem:[%s215 + $0x1c] sm:$0xf] %v230
                %v232 = vld [vmem:[%s214 + $0x20] sm:$0xf]
                %233 = vst [vmem:[%s215 + $0x20] sm:$0xf] %v232
                %v234 = vld [vmem:[%s214 + $0x24] sm:$0xf]
                %235 = vst [vmem:[%s215 + $0x24] sm:$0xf] %v234
                %v236 = vld [vmem:[%s214 + $0x28] sm:$0xf]
                %237 = vst [vmem:[%s215 + $0x28] sm:$0xf] %v236
                %v238 = vld [vmem:[%s214 + $0x2c] sm:$0xf]
                %239 = vst [vmem:[%s215 + $0x2c] sm:$0xf] %v238
                %v240 = vld [vmem:[%s214 + $0x30] sm:$0xf]
                %241 = vst [vmem:[%s215 + $0x30] sm:$0xf] %v240
                %v242 = vld [vmem:[%s214 + $0x34] sm:$0xf]
                %243 = vst [vmem:[%s215 + $0x34] sm:$0xf] %v242
                %v244 = vld [vmem:[%s214 + $0x38] sm:$0xf]
                %245 = vst [vmem:[%s215 + $0x38] sm:$0xf] %v244
                %v246 = vld [vmem:[%s214 + $0x3c] sm:$0xf]
                %247 = vst [vmem:[%s215 + $0x3c] sm:$0xf] %v246
                %v248 = vld [vmem:[%s214 + $0x80] sm:$0xf]
                %249 = vst [vmem:[%s215 + $0x40] sm:$0xf] %v248
                %v250 = vld [vmem:[%s214 + $0x84] sm:$0xf]
                %251 = vst [vmem:[%s215 + $0x44] sm:$0xf] %v250
                %v252 = vld [vmem:[%s214 + $0x88] sm:$0xf]
                %253 = vst [vmem:[%s215 + $0x48] sm:$0xf] %v252
                %v254 = vld [vmem:[%s214 + $0x8c] sm:$0xf]
                %255 = vst [vmem:[%s215 + $0x4c] sm:$0xf] %v254
                %v256 = vld [vmem:[%s214 + $0x90] sm:$0xf]
                %257 = vst [vmem:[%s215 + $0x50] sm:$0xf] %v256
                %v258 = vld [vmem:[%s214 + $0x94] sm:$0xf]
                %259 = vst [vmem:[%s215 + $0x54] sm:$0xf] %v258
                %v260 = vld [vmem:[%s214 + $0x98] sm:$0xf]
                %261 = vst [vmem:[%s215 + $0x58] sm:$0xf] %v260
                %v262 = vld [vmem:[%s214 + $0x9c] sm:$0xf]
                %263 = vst [vmem:[%s215 + $0x5c] sm:$0xf] %v262
                %v264 = vld [vmem:[%s214 + $0xa0] sm:$0xf]
                %265 = vst [vmem:[%s215 + $0x60] sm:$0xf] %v264
                %v266 = vld [vmem:[%s214 + $0xa4] sm:$0xf]
                %267 = vst [vmem:[%s215 + $0x64] sm:$0xf] %v266
                %v268 = vld [vmem:[%s214 + $0xa8] sm:$0xf]
                %269 = vst [vmem:[%s215 + $0x68] sm:$0xf] %v268
                %v270 = vld [vmem:[%s214 + $0xac] sm:$0xf]
                %271 = vst [vmem:[%s215 + $0x6c] sm:$0xf] %v270
                %v272 = vld [vmem:[%s214 + $0xb0] sm:$0xf]
                %273 = vst [vmem:[%s215 + $0x70] sm:$0xf] %v272
                %v274 = vld [vmem:[%s214 + $0xb4] sm:$0xf]
                %275 = vst [vmem:[%s215 + $0x74] sm:$0xf] %v274
                %v276 = vld [vmem:[%s214 + $0xb8] sm:$0xf]
                %277 = vst [vmem:[%s215 + $0x78] sm:$0xf] %v276
                %v278 = vld [vmem:[%s214 + $0xbc] sm:$0xf]
                %279 = vst [vmem:[%s215 + $0x7c] sm:$0xf] %v278
                %v280 = vld [vmem:[%s214 + $0x100] sm:$0xf]
                %281 = vst [vmem:[%s215 + $0x80] sm:$0xf] %v280
                %v282 = vld [vmem:[%s214 + $0x104] sm:$0xf]
                %283 = vst [vmem:[%s215 + $0x84] sm:$0xf] %v282
                %v284 = vld [vmem:[%s214 + $0x108] sm:$0xf]
                %285 = vst [vmem:[%s215 + $0x88] sm:$0xf] %v284
                %v286 = vld [vmem:[%s214 + $0x10c] sm:$0xf]
                %287 = vst [vmem:[%s215 + $0x8c] sm:$0xf] %v286
                %v288 = vld [vmem:[%s214 + $0x110] sm:$0xf]
                %289 = vst [vmem:[%s215 + $0x90] sm:$0xf] %v288
                %v290 = vld [vmem:[%s214 + $0x114] sm:$0xf]
                %291 = vst [vmem:[%s215 + $0x94] sm:$0xf] %v290
                %v292 = vld [vmem:[%s214 + $0x118] sm:$0xf]
                %293 = vst [vmem:[%s215 + $0x98] sm:$0xf] %v292
                %v294 = vld [vmem:[%s214 + $0x11c] sm:$0xf]
                %295 = vst [vmem:[%s215 + $0x9c] sm:$0xf] %v294
                %v296 = vld [vmem:[%s214 + $0x120] sm:$0xf]
                %297 = vst [vmem:[%s215 + $0xa0] sm:$0xf] %v296
                %v298 = vld [vmem:[%s214 + $0x124] sm:$0xf]
                %299 = vst [vmem:[%s215 + $0xa4] sm:$0xf] %v298
                %v300 = vld [vmem:[%s214 + $0x128] sm:$0xf]
                %301 = vst [vmem:[%s215 + $0xa8] sm:$0xf] %v300
                %v302 = vld [vmem:[%s214 + $0x12c] sm:$0xf]
                %303 = vst [vmem:[%s215 + $0xac] sm:$0xf] %v302
                %v304 = vld [vmem:[%s214 + $0x130] sm:$0xf]
                %305 = vst [vmem:[%s215 + $0xb0] sm:$0xf] %v304
                %v306 = vld [vmem:[%s214 + $0x134] sm:$0xf]
                %307 = vst [vmem:[%s215 + $0xb4] sm:$0xf] %v306
                %v308 = vld [vmem:[%s214 + $0x138] sm:$0xf]
                %309 = vst [vmem:[%s215 + $0xb8] sm:$0xf] %v308
                %v310 = vld [vmem:[%s214 + $0x13c] sm:$0xf]
                %311 = vst [vmem:[%s215 + $0xbc] sm:$0xf] %v310
                %v312 = vld [vmem:[%s214 + $0x180] sm:$0xf]
                %313 = vst [vmem:[%s215 + $0xc0] sm:$0xf] %v312
                %v314 = vld [vmem:[%s214 + $0x184] sm:$0xf]
                %315 = vst [vmem:[%s215 + $0xc4] sm:$0xf] %v314
                %v316 = vld [vmem:[%s214 + $0x188] sm:$0xf]
                %317 = vst [vmem:[%s215 + $0xc8] sm:$0xf] %v316
                %v318 = vld [vmem:[%s214 + $0x18c] sm:$0xf]
                %319 = vst [vmem:[%s215 + $0xcc] sm:$0xf] %v318
                %v320 = vld [vmem:[%s214 + $0x190] sm:$0xf]
                %321 = vst [vmem:[%s215 + $0xd0] sm:$0xf] %v320
                %v322 = vld [vmem:[%s214 + $0x194] sm:$0xf]
                %323 = vst [vmem:[%s215 + $0xd4] sm:$0xf] %v322
                %v324 = vld [vmem:[%s214 + $0x198] sm:$0xf]
                %325 = vst [vmem:[%s215 + $0xd8] sm:$0xf] %v324
                %v326 = vld [vmem:[%s214 + $0x19c] sm:$0xf]
                %327 = vst [vmem:[%s215 + $0xdc] sm:$0xf] %v326
                %v328 = vld [vmem:[%s214 + $0x1a0] sm:$0xf]
                %329 = vst [vmem:[%s215 + $0xe0] sm:$0xf] %v328
                %v330 = vld [vmem:[%s214 + $0x1a4] sm:$0xf]
                %331 = vst [vmem:[%s215 + $0xe4] sm:$0xf] %v330
                %v332 = vld [vmem:[%s214 + $0x1a8] sm:$0xf]
                %333 = vst [vmem:[%s215 + $0xe8] sm:$0xf] %v332
                %v334 = vld [vmem:[%s214 + $0x1ac] sm:$0xf]
                %335 = vst [vmem:[%s215 + $0xec] sm:$0xf] %v334
                %v336 = vld [vmem:[%s214 + $0x1b0] sm:$0xf]
                %337 = vst [vmem:[%s215 + $0xf0] sm:$0xf] %v336
                %v338 = vld [vmem:[%s214 + $0x1b4] sm:$0xf]
                %339 = vst [vmem:[%s215 + $0xf4] sm:$0xf] %v338
                %v340 = vld [vmem:[%s214 + $0x1b8] sm:$0xf]
                %341 = vst [vmem:[%s215 + $0xf8] sm:$0xf] %v340
                %v342 = vld [vmem:[%s214 + $0x1bc] sm:$0xf]
                %343 = vst [vmem:[%s215 + $0xfc] sm:$0xf] %v342
                %v344 = vld [vmem:[%s214 + $0x200] sm:$0xf]
                %345 = vst [vmem:[%s215 + $0x100] sm:$0xf] %v344
                %v346 = vld [vmem:[%s214 + $0x204] sm:$0xf]
                %347 = vst [vmem:[%s215 + $0x104] sm:$0xf] %v346
                %v348 = vld [vmem:[%s214 + $0x208] sm:$0xf]
                %349 = vst [vmem:[%s215 + $0x108] sm:$0xf] %v348
                %v350 = vld [vmem:[%s214 + $0x20c] sm:$0xf]
                %351 = vst [vmem:[%s215 + $0x10c] sm:$0xf] %v350
                %v352 = vld [vmem:[%s214 + $0x210] sm:$0xf]
                %353 = vst [vmem:[%s215 + $0x110] sm:$0xf] %v352
                %v354 = vld [vmem:[%s214 + $0x214] sm:$0xf]
                %355 = vst [vmem:[%s215 + $0x114] sm:$0xf] %v354
                %v356 = vld [vmem:[%s214 + $0x218] sm:$0xf]
                %357 = vst [vmem:[%s215 + $0x118] sm:$0xf] %v356
                %v358 = vld [vmem:[%s214 + $0x21c] sm:$0xf]
                %359 = vst [vmem:[%s215 + $0x11c] sm:$0xf] %v358
                %v360 = vld [vmem:[%s214 + $0x220] sm:$0xf]
                %361 = vst [vmem:[%s215 + $0x120] sm:$0xf] %v360
                %v362 = vld [vmem:[%s214 + $0x224] sm:$0xf]
                %363 = vst [vmem:[%s215 + $0x124] sm:$0xf] %v362
                %v364 = vld [vmem:[%s214 + $0x228] sm:$0xf]
                %365 = vst [vmem:[%s215 + $0x128] sm:$0xf] %v364
                %v366 = vld [vmem:[%s214 + $0x22c] sm:$0xf]
                %367 = vst [vmem:[%s215 + $0x12c] sm:$0xf] %v366
                %v368 = vld [vmem:[%s214 + $0x230] sm:$0xf]
                %369 = vst [vmem:[%s215 + $0x130] sm:$0xf] %v368
                %v370 = vld [vmem:[%s214 + $0x234] sm:$0xf]
                %371 = vst [vmem:[%s215 + $0x134] sm:$0xf] %v370
                %v372 = vld [vmem:[%s214 + $0x238] sm:$0xf]
                %373 = vst [vmem:[%s215 + $0x138] sm:$0xf] %v372
                %v374 = vld [vmem:[%s214 + $0x23c] sm:$0xf]
                %375 = vst [vmem:[%s215 + $0x13c] sm:$0xf] %v374
                %v376 = vld [vmem:[%s214 + $0x280] sm:$0xf]
                %377 = vst [vmem:[%s215 + $0x140] sm:$0xf] %v376
                %v378 = vld [vmem:[%s214 + $0x284] sm:$0xf]
                %379 = vst [vmem:[%s215 + $0x144] sm:$0xf] %v378
                %v380 = vld [vmem:[%s214 + $0x288] sm:$0xf]
                %381 = vst [vmem:[%s215 + $0x148] sm:$0xf] %v380
                %v382 = vld [vmem:[%s214 + $0x28c] sm:$0xf]
                %383 = vst [vmem:[%s215 + $0x14c] sm:$0xf] %v382
                %v384 = vld [vmem:[%s214 + $0x290] sm:$0xf]
                %385 = vst [vmem:[%s215 + $0x150] sm:$0xf] %v384
                %v386 = vld [vmem:[%s214 + $0x294] sm:$0xf]
                %387 = vst [vmem:[%s215 + $0x154] sm:$0xf] %v386
                %v388 = vld [vmem:[%s214 + $0x298] sm:$0xf]
                %389 = vst [vmem:[%s215 + $0x158] sm:$0xf] %v388
                %v390 = vld [vmem:[%s214 + $0x29c] sm:$0xf]
                %391 = vst [vmem:[%s215 + $0x15c] sm:$0xf] %v390
                %v392 = vld [vmem:[%s214 + $0x2a0] sm:$0xf]
                %393 = vst [vmem:[%s215 + $0x160] sm:$0xf] %v392
                %v394 = vld [vmem:[%s214 + $0x2a4] sm:$0xf]
                %395 = vst [vmem:[%s215 + $0x164] sm:$0xf] %v394
                %v396 = vld [vmem:[%s214 + $0x2a8] sm:$0xf]
                %397 = vst [vmem:[%s215 + $0x168] sm:$0xf] %v396
                %v398 = vld [vmem:[%s214 + $0x2ac] sm:$0xf]
                %399 = vst [vmem:[%s215 + $0x16c] sm:$0xf] %v398
                %v400 = vld [vmem:[%s214 + $0x2b0] sm:$0xf]
                %401 = vst [vmem:[%s215 + $0x170] sm:$0xf] %v400
                %v402 = vld [vmem:[%s214 + $0x2b4] sm:$0xf]
                %403 = vst [vmem:[%s215 + $0x174] sm:$0xf] %v402
                %v404 = vld [vmem:[%s214 + $0x2b8] sm:$0xf]
                %405 = vst [vmem:[%s215 + $0x178] sm:$0xf] %v404
                %v406 = vld [vmem:[%s214 + $0x2bc] sm:$0xf]
                %407 = vst [vmem:[%s215 + $0x17c] sm:$0xf] %v406
                %v408 = vld [vmem:[%s214 + $0x300] sm:$0xf]
                %409 = vst [vmem:[%s215 + $0x180] sm:$0xf] %v408
                %v410 = vld [vmem:[%s214 + $0x304] sm:$0xf]
                %411 = vst [vmem:[%s215 + $0x184] sm:$0xf] %v410
                %v412 = vld [vmem:[%s214 + $0x308] sm:$0xf]
                %413 = vst [vmem:[%s215 + $0x188] sm:$0xf] %v412
                %v414 = vld [vmem:[%s214 + $0x30c] sm:$0xf]
                %415 = vst [vmem:[%s215 + $0x18c] sm:$0xf] %v414
                %v416 = vld [vmem:[%s214 + $0x310] sm:$0xf]
                %417 = vst [vmem:[%s215 + $0x190] sm:$0xf] %v416
                %v418 = vld [vmem:[%s214 + $0x314] sm:$0xf]
                %419 = vst [vmem:[%s215 + $0x194] sm:$0xf] %v418
                %v420 = vld [vmem:[%s214 + $0x318] sm:$0xf]
                %421 = vst [vmem:[%s215 + $0x198] sm:$0xf] %v420
                %v422 = vld [vmem:[%s214 + $0x31c] sm:$0xf]
                %423 = vst [vmem:[%s215 + $0x19c] sm:$0xf] %v422
                %v424 = vld [vmem:[%s214 + $0x320] sm:$0xf]
                %425 = vst [vmem:[%s215 + $0x1a0] sm:$0xf] %v424
                %v426 = vld [vmem:[%s214 + $0x324] sm:$0xf]
                %427 = vst [vmem:[%s215 + $0x1a4] sm:$0xf] %v426
                %v428 = vld [vmem:[%s214 + $0x328] sm:$0xf]
                %429 = vst [vmem:[%s215 + $0x1a8] sm:$0xf] %v428
                %v430 = vld [vmem:[%s214 + $0x32c] sm:$0xf]
                %431 = vst [vmem:[%s215 + $0x1ac] sm:$0xf] %v430
                %v432 = vld [vmem:[%s214 + $0x330] sm:$0xf]
                %433 = vst [vmem:[%s215 + $0x1b0] sm:$0xf] %v432
                %v434 = vld [vmem:[%s214 + $0x334] sm:$0xf]
                %435 = vst [vmem:[%s215 + $0x1b4] sm:$0xf] %v434
                %v436 = vld [vmem:[%s214 + $0x338] sm:$0xf]
                %437 = vst [vmem:[%s215 + $0x1b8] sm:$0xf] %v436
                %v438 = vld [vmem:[%s214 + $0x33c] sm:$0xf]
                %439 = vst [vmem:[%s215 + $0x1bc] sm:$0xf] %v438
                %v440 = vld [vmem:[%s214 + $0x380] sm:$0xf]
                %441 = vst [vmem:[%s215 + $0x1c0] sm:$0xf] %v440
                %v442 = vld [vmem:[%s214 + $0x384] sm:$0xf]
                %443 = vst [vmem:[%s215 + $0x1c4] sm:$0xf] %v442
                %v444 = vld [vmem:[%s214 + $0x388] sm:$0xf]
                %445 = vst [vmem:[%s215 + $0x1c8] sm:$0xf] %v444
                %v446 = vld [vmem:[%s214 + $0x38c] sm:$0xf]
                %447 = vst [vmem:[%s215 + $0x1cc] sm:$0xf] %v446
                %v448 = vld [vmem:[%s214 + $0x390] sm:$0xf]
                %449 = vst [vmem:[%s215 + $0x1d0] sm:$0xf] %v448
                %v450 = vld [vmem:[%s214 + $0x394] sm:$0xf]
                %451 = vst [vmem:[%s215 + $0x1d4] sm:$0xf] %v450
                %v452 = vld [vmem:[%s214 + $0x398] sm:$0xf]
                %453 = vst [vmem:[%s215 + $0x1d8] sm:$0xf] %v452
                %v454 = vld [vmem:[%s214 + $0x39c] sm:$0xf]
                %455 = vst [vmem:[%s215 + $0x1dc] sm:$0xf] %v454
                %v456 = vld [vmem:[%s214 + $0x3a0] sm:$0xf]
                %457 = vst [vmem:[%s215 + $0x1e0] sm:$0xf] %v456
                %v458 = vld [vmem:[%s214 + $0x3a4] sm:$0xf]
                %459 = vst [vmem:[%s215 + $0x1e4] sm:$0xf] %v458
                %v460 = vld [vmem:[%s214 + $0x3a8] sm:$0xf]
                %461 = vst [vmem:[%s215 + $0x1e8] sm:$0xf] %v460
                %v462 = vld [vmem:[%s214 + $0x3ac] sm:$0xf]
                %463 = vst [vmem:[%s215 + $0x1ec] sm:$0xf] %v462
                %v464 = vld [vmem:[%s214 + $0x3b0] sm:$0xf]
                %465 = vst [vmem:[%s215 + $0x1f0] sm:$0xf] %v464
                %v466 = vld [vmem:[%s214 + $0x3b4] sm:$0xf]
                %467 = vst [vmem:[%s215 + $0x1f4] sm:$0xf] %v466
                %v468 = vld [vmem:[%s214 + $0x3b8] sm:$0xf]
                %469 = vst [vmem:[%s215 + $0x1f8] sm:$0xf] %v468
                %v470 = vld [vmem:[%s214 + $0x3bc] sm:$0xf]
                %471 = vst [vmem:[%s215 + $0x1fc] sm:$0xf] %v470
                %v472 = vld [vmem:[%s214 + $0x400] sm:$0xf]
                %473 = vst [vmem:[%s215 + $0x200] sm:$0xf] %v472
                %v474 = vld [vmem:[%s214 + $0x404] sm:$0xf]
                %475 = vst [vmem:[%s215 + $0x204] sm:$0xf] %v474
                %v476 = vld [vmem:[%s214 + $0x408] sm:$0xf]
                %477 = vst [vmem:[%s215 + $0x208] sm:$0xf] %v476
                %v478 = vld [vmem:[%s214 + $0x40c] sm:$0xf]
                %479 = vst [vmem:[%s215 + $0x20c] sm:$0xf] %v478
                %v480 = vld [vmem:[%s214 + $0x410] sm:$0xf]
                %481 = vst [vmem:[%s215 + $0x210] sm:$0xf] %v480
                %v482 = vld [vmem:[%s214 + $0x414] sm:$0xf]
                %483 = vst [vmem:[%s215 + $0x214] sm:$0xf] %v482
                %v484 = vld [vmem:[%s214 + $0x418] sm:$0xf]
                %485 = vst [vmem:[%s215 + $0x218] sm:$0xf] %v484
                %v486 = vld [vmem:[%s214 + $0x41c] sm:$0xf]
                %487 = vst [vmem:[%s215 + $0x21c] sm:$0xf] %v486
                %v488 = vld [vmem:[%s214 + $0x420] sm:$0xf]
                %489 = vst [vmem:[%s215 + $0x220] sm:$0xf] %v488
                %v490 = vld [vmem:[%s214 + $0x424] sm:$0xf]
                %491 = vst [vmem:[%s215 + $0x224] sm:$0xf] %v490
                %v492 = vld [vmem:[%s214 + $0x428] sm:$0xf]
                %493 = vst [vmem:[%s215 + $0x228] sm:$0xf] %v492
                %v494 = vld [vmem:[%s214 + $0x42c] sm:$0xf]
                %495 = vst [vmem:[%s215 + $0x22c] sm:$0xf] %v494
                %v496 = vld [vmem:[%s214 + $0x430] sm:$0xf]
                %497 = vst [vmem:[%s215 + $0x230] sm:$0xf] %v496
                %v498 = vld [vmem:[%s214 + $0x434] sm:$0xf]
                %499 = vst [vmem:[%s215 + $0x234] sm:$0xf] %v498
                %v500 = vld [vmem:[%s214 + $0x438] sm:$0xf]
                %501 = vst [vmem:[%s215 + $0x238] sm:$0xf] %v500
                %v502 = vld [vmem:[%s214 + $0x43c] sm:$0xf]
                %503 = vst [vmem:[%s215 + $0x23c] sm:$0xf] %v502
              $region49: #{tpu_custom_call.1} parent=43 // loop_footer
                %s213 = sadd.s32 1, %s209
              $region50: #{tpu_custom_call.1} parent=43 // loop_footer_branch
                %208 = sbr.rel target = $region46
              $region51: #{tpu_custom_call.1} parent=43 // loop_exit
                _
            $region44: #{tpu_custom_call.1} parent=35 // pred_fallthru
              _
          $region36: #{tpu_custom_call.1} parent=31 // pred_fallthru
            _
          %811 = vnop
        $region32: #{tpu_custom_call.1} parent=23 // pred_fallthru
          _
      $region24: #{tpu_custom_call.1} parent=5 // pred_fallthru
        _
      %p812 = scmp.le.s32.totalorder 1, %s13
      %p813 = scmp.lt.s32.totalorder %s13, 5
      %p814 = pnand %p812, %p813
      %p815 = pneg %p814
      // Predicated region
      $region70: #{tpu_custom_call.1} parent=5 // pred_check
        _
      $region71: #{tpu_custom_call.1} parent=5 // pred_check_branch
        %817 = sbr.rel (%p814) target = $region73
      $region72: #{tpu_custom_call.1} parent=5 // pred_region
        %s818 = ssub.s32 %s13, 1
        %s819 = sand.u32 %s68, 1
        %s820 = sand.u32 %s68, 1
        %s821 = smul.addr %s820, 576
        %s822 = scalar_lea.vmem [#allocation2], %s821
        // Predicated region
        $region74: #{tpu_custom_call.1} parent=72 // pred_check
          %p823 = pneg %p81
        $region75: #{tpu_custom_call.1} parent=72 // pred_check_branch
          %825 = sbr.rel (%p823) target = $region77
        $region76: #{tpu_custom_call.1} parent=72 // pred_region
          _
        $region77: #{tpu_custom_call.1} parent=72 // pred_fallthru
          _
        %s826 = smul.u32 16, %s23
        %p827 = scmp.lt.s32.totalorder %s22, 1
        %s828 = scalar_select %p827, %s22, 1
        %p829 = scmp.lt.s32.totalorder %s826, 31
        %s830 = scalar_select %p829, %s826, 31
        %s831 = smul.addr %s828, 32
        %s832 = sadd.s32 %s830, %s831
        %s833 = smul.addr %s832, 4
        %s834 = scalar_lea.vmem %s0, %s833
        %p835 = pneg %p53
        %p836 = pneg %p50
        %s837 = sand.u32 %s68, 1
        %s838 = sand.u32 %s68, 1
        %s839 = smul.addr %s838, 576
        %s840 = scalar_lea.vmem [#allocation2], %s839
        %p841 = pneg %p81
        %p842 = pneg %p78
        %p843 = pneg %p102
        %p844 = pneg %p99
        %p845 = pneg %p123
        %p846 = pneg %p120
        %p847 = pneg %p151
        %p848 = pneg %p148
        %s849 = sand.u32 %s138, 1
        %s850 = scalar_lea.sflag [#allocation4], %s849
        %s851 = sand.u32 %s138, 1
        %s852 = smul.addr %s851, 128
        %s853 = scalar_lea.vmem [#allocation3], %s852
        %s854 = smul.u32 16, %s23
        %p855 = scmp.lt.s32.totalorder %s22, 1
        %s856 = scalar_select %p855, %s22, 1
        %p857 = scmp.lt.s32.totalorder %s854, 31
        %s858 = scalar_select %p857, %s854, 31
        %s859 = smul.addr %s856, 32
        %s860 = sadd.s32 %s858, %s859
        %s861 = smul.addr %s860, 4
        %s862 = scalar_lea.vmem %s0, %s861
        %s863 = smul.u32 16, %s23
        %s864 = smul.u32 16, %s23
        %s865 = smul.u32 16, %s23
        %v867 = vld [vmem:[%s862] sm:$0xf]
        %v868 = vld [vmem:[%s862 + $0x4] sm:$0xf]
        %v869 = vld [vmem:[%s862 + $0x8] sm:$0xf]
        %v870 = vld [vmem:[%s862 + $0xc] sm:$0xf]
        %v871 = vld [vmem:[%s862 + $0x10] sm:$0xf]
        %v872 = vld [vmem:[%s862 + $0x14] sm:$0xf]
        %v873 = vld [vmem:[%s862 + $0x18] sm:$0xf]
        %v874 = vld [vmem:[%s862 + $0x1c] sm:$0xf]
        %v875 = vld [vmem:[%s862 + $0x20] sm:$0xf]
        %v876 = vld [vmem:[%s862 + $0x24] sm:$0xf]
        %v877 = vld [vmem:[%s862 + $0x28] sm:$0xf]
        %v878 = vld [vmem:[%s862 + $0x2c] sm:$0xf]
        %v879 = vld [vmem:[%s862 + $0x30] sm:$0xf]
        %v880 = vld [vmem:[%s862 + $0x34] sm:$0xf]
        %v881 = vld [vmem:[%s862 + $0x38] sm:$0xf]
        %v882 = vld [vmem:[%s862 + $0x3c] sm:$0xf]
        %v883 = vld [vmem:[%s2] sm:$0xf]
        %v884 = vld [vmem:[%s822] sm:$0xf]
        %v885 = vld [vmem:[%s822 + $0x4] sm:$0xf]
        %v886 = vld [vmem:[%s822 + $0x8] sm:$0xf]
        %v887 = vld [vmem:[%s822 + $0xc] sm:$0xf]
        %v888 = vld [vmem:[%s822 + $0x10] sm:$0xf]
        %v889 = vld [vmem:[%s822 + $0x14] sm:$0xf]
        %v890 = vld [vmem:[%s822 + $0x18] sm:$0xf]
        %v891 = vld [vmem:[%s822 + $0x1c] sm:$0xf]
        %v892 = vld [vmem:[%s822 + $0x20] sm:$0xf]
        %v893 = vld [vmem:[%s822 + $0x24] sm:$0xf]
        %v894 = vld [vmem:[%s822 + $0x28] sm:$0xf]
        %v895 = vld [vmem:[%s822 + $0x2c] sm:$0xf]
        %v896 = vld [vmem:[%s822 + $0x30] sm:$0xf]
        %v897 = vld [vmem:[%s822 + $0x34] sm:$0xf]
        %v898 = vld [vmem:[%s822 + $0x38] sm:$0xf]
        %v899 = vld [vmem:[%s822 + $0x3c] sm:$0xf]
        %v900 = vld [vmem:[%s822 + $0x40] sm:$0xf]
        %v901 = vld [vmem:[%s822 + $0x44] sm:$0xf]
        %v902 = vld [vmem:[%s822 + $0x48] sm:$0xf]
        %v903 = vld [vmem:[%s822 + $0x4c] sm:$0xf]
        %v904 = vld [vmem:[%s822 + $0x50] sm:$0xf]
        %v905 = vld [vmem:[%s822 + $0x54] sm:$0xf]
        %v906 = vld [vmem:[%s822 + $0x58] sm:$0xf]
        %v907 = vld [vmem:[%s822 + $0x5c] sm:$0xf]
        %v908 = vld [vmem:[%s822 + $0x60] sm:$0xf]
        %v909 = vld [vmem:[%s822 + $0x64] sm:$0xf]
        %v910 = vld [vmem:[%s822 + $0x68] sm:$0xf]
        %v911 = vld [vmem:[%s822 + $0x6c] sm:$0xf]
        %v912 = vld [vmem:[%s822 + $0x70] sm:$0xf]
        %v913 = vld [vmem:[%s822 + $0x74] sm:$0xf]
        %v914 = vld [vmem:[%s822 + $0x78] sm:$0xf]
        %v915 = vld [vmem:[%s822 + $0x7c] sm:$0xf]
        %v916 = vld [vmem:[%s822 + $0x80] sm:$0xf]
        %v917 = vld [vmem:[%s822 + $0x84] sm:$0xf]
        %v918 = vld [vmem:[%s822 + $0x88] sm:$0xf]
        %v919 = vld [vmem:[%s822 + $0x8c] sm:$0xf]
        %v920 = vld [vmem:[%s822 + $0x90] sm:$0xf]
        %v921 = vld [vmem:[%s822 + $0x94] sm:$0xf]
        %v922 = vld [vmem:[%s822 + $0x98] sm:$0xf]
        %v923 = vld [vmem:[%s822 + $0x9c] sm:$0xf]
        %v924 = vld [vmem:[%s822 + $0xa0] sm:$0xf]
        %v925 = vld [vmem:[%s822 + $0xa4] sm:$0xf]
        %v926 = vld [vmem:[%s822 + $0xa8] sm:$0xf]
        %v927 = vld [vmem:[%s822 + $0xac] sm:$0xf]
        %v928 = vld [vmem:[%s822 + $0xb0] sm:$0xf]
        %v929 = vld [vmem:[%s822 + $0xb4] sm:$0xf]
        %v930 = vld [vmem:[%s822 + $0xb8] sm:$0xf]
        %v931 = vld [vmem:[%s822 + $0xbc] sm:$0xf]
        %v932 = vld [vmem:[%s822 + $0xc0] sm:$0xf]
        %v933 = vld [vmem:[%s822 + $0xc4] sm:$0xf]
        %v934 = vld [vmem:[%s822 + $0xc8] sm:$0xf]
        %v935 = vld [vmem:[%s822 + $0xcc] sm:$0xf]
        %v936 = vld [vmem:[%s822 + $0xd0] sm:$0xf]
        %v937 = vld [vmem:[%s822 + $0xd4] sm:$0xf]
        %v938 = vld [vmem:[%s822 + $0xd8] sm:$0xf]
        %v939 = vld [vmem:[%s822 + $0xdc] sm:$0xf]
        %v940 = vld [vmem:[%s822 + $0xe0] sm:$0xf]
        %v941 = vld [vmem:[%s822 + $0xe4] sm:$0xf]
        %v942 = vld [vmem:[%s822 + $0xe8] sm:$0xf]
        %v943 = vld [vmem:[%s822 + $0xec] sm:$0xf]
        %v944 = vld [vmem:[%s822 + $0xf0] sm:$0xf]
        %v945 = vld [vmem:[%s822 + $0xf4] sm:$0xf]
        %v946 = vld [vmem:[%s822 + $0xf8] sm:$0xf]
        %v947 = vld [vmem:[%s822 + $0xfc] sm:$0xf]
        %v948 = vld [vmem:[%s822 + $0x100] sm:$0xf]
        %v949 = vld [vmem:[%s822 + $0x104] sm:$0xf]
        %v950 = vld [vmem:[%s822 + $0x108] sm:$0xf]
        %v951 = vld [vmem:[%s822 + $0x10c] sm:$0xf]
        %v952 = vld [vmem:[%s822 + $0x110] sm:$0xf]
        %v953 = vld [vmem:[%s822 + $0x114] sm:$0xf]
        %v954 = vld [vmem:[%s822 + $0x118] sm:$0xf]
        %v955 = vld [vmem:[%s822 + $0x11c] sm:$0xf]
        %v956 = vld [vmem:[%s822 + $0x120] sm:$0xf]
        %v957 = vld [vmem:[%s822 + $0x124] sm:$0xf]
        %v958 = vld [vmem:[%s822 + $0x128] sm:$0xf]
        %v959 = vld [vmem:[%s822 + $0x12c] sm:$0xf]
        %v960 = vld [vmem:[%s822 + $0x130] sm:$0xf]
        %v961 = vld [vmem:[%s822 + $0x134] sm:$0xf]
        %v962 = vld [vmem:[%s822 + $0x138] sm:$0xf]
        %v963 = vld [vmem:[%s822 + $0x13c] sm:$0xf]
        %v964 = vld [vmem:[%s822 + $0x140] sm:$0xf]
        %v965 = vld [vmem:[%s822 + $0x144] sm:$0xf]
        %v966 = vld [vmem:[%s822 + $0x148] sm:$0xf]
        %v967 = vld [vmem:[%s822 + $0x14c] sm:$0xf]
        %v968 = vld [vmem:[%s822 + $0x150] sm:$0xf]
        %v969 = vld [vmem:[%s822 + $0x154] sm:$0xf]
        %v970 = vld [vmem:[%s822 + $0x158] sm:$0xf]
        %v971 = vld [vmem:[%s822 + $0x15c] sm:$0xf]
        %v972 = vld [vmem:[%s822 + $0x160] sm:$0xf]
        %v973 = vld [vmem:[%s822 + $0x164] sm:$0xf]
        %v974 = vld [vmem:[%s822 + $0x168] sm:$0xf]
        %v975 = vld [vmem:[%s822 + $0x16c] sm:$0xf]
        %v976 = vld [vmem:[%s822 + $0x170] sm:$0xf]
        %v977 = vld [vmem:[%s822 + $0x174] sm:$0xf]
        %v978 = vld [vmem:[%s822 + $0x178] sm:$0xf]
        %v979 = vld [vmem:[%s822 + $0x17c] sm:$0xf]
        %v980 = vld [vmem:[%s822 + $0x180] sm:$0xf]
        %v981 = vld [vmem:[%s822 + $0x184] sm:$0xf]
        %v982 = vld [vmem:[%s822 + $0x188] sm:$0xf]
        %v983 = vld [vmem:[%s822 + $0x18c] sm:$0xf]
        %v984 = vld [vmem:[%s822 + $0x190] sm:$0xf]
        %v985 = vld [vmem:[%s822 + $0x194] sm:$0xf]
        %v986 = vld [vmem:[%s822 + $0x198] sm:$0xf]
        %v987 = vld [vmem:[%s822 + $0x19c] sm:$0xf]
        %v988 = vld [vmem:[%s822 + $0x1a0] sm:$0xf]
        %v989 = vld [vmem:[%s822 + $0x1a4] sm:$0xf]
        %v990 = vld [vmem:[%s822 + $0x1a8] sm:$0xf]
        %v991 = vld [vmem:[%s822 + $0x1ac] sm:$0xf]
        %v992 = vld [vmem:[%s822 + $0x1b0] sm:$0xf]
        %v993 = vld [vmem:[%s822 + $0x1b4] sm:$0xf]
        %v994 = vld [vmem:[%s822 + $0x1b8] sm:$0xf]
        %v995 = vld [vmem:[%s822 + $0x1bc] sm:$0xf]
        %v996 = vld [vmem:[%s822 + $0x1c0] sm:$0xf]
        %v997 = vld [vmem:[%s822 + $0x1c4] sm:$0xf]
        %v998 = vld [vmem:[%s822 + $0x1c8] sm:$0xf]
        %v999 = vld [vmem:[%s822 + $0x1cc] sm:$0xf]
        %v1000 = vld [vmem:[%s822 + $0x1d0] sm:$0xf]
        %v1001 = vld [vmem:[%s822 + $0x1d4] sm:$0xf]
        %v1002 = vld [vmem:[%s822 + $0x1d8] sm:$0xf]
        %v1003 = vld [vmem:[%s822 + $0x1dc] sm:$0xf]
        %v1004 = vld [vmem:[%s822 + $0x1e0] sm:$0xf]
        %v1005 = vld [vmem:[%s822 + $0x1e4] sm:$0xf]
        %v1006 = vld [vmem:[%s822 + $0x1e8] sm:$0xf]
        %v1007 = vld [vmem:[%s822 + $0x1ec] sm:$0xf]
        %v1008 = vld [vmem:[%s822 + $0x1f0] sm:$0xf]
        %v1009 = vld [vmem:[%s822 + $0x1f4] sm:$0xf]
        %v1010 = vld [vmem:[%s822 + $0x1f8] sm:$0xf]
        %v1011 = vld [vmem:[%s822 + $0x1fc] sm:$0xf]
        %v1012 = vld [vmem:[%s822 + $0x200] sm:$0xf]
        %v1013 = vld [vmem:[%s822 + $0x204] sm:$0xf]
        %v1014 = vld [vmem:[%s822 + $0x208] sm:$0xf]
        %v1015 = vld [vmem:[%s822 + $0x20c] sm:$0xf]
        %v1016 = vld [vmem:[%s822 + $0x210] sm:$0xf]
        %v1017 = vld [vmem:[%s822 + $0x214] sm:$0xf]
        %v1018 = vld [vmem:[%s822 + $0x218] sm:$0xf]
        %v1019 = vld [vmem:[%s822 + $0x21c] sm:$0xf]
        %v1020 = vld [vmem:[%s822 + $0x220] sm:$0xf]
        %v1021 = vld [vmem:[%s822 + $0x224] sm:$0xf]
        %v1022 = vld [vmem:[%s822 + $0x228] sm:$0xf]
        %v1023 = vld [vmem:[%s822 + $0x22c] sm:$0xf]
        %v1024 = vld [vmem:[%s822 + $0x230] sm:$0xf]
        %v1025 = vld [vmem:[%s822 + $0x234] sm:$0xf]
        %v1026 = vld [vmem:[%s822 + $0x238] sm:$0xf]
        %v1027 = vld [vmem:[%s822 + $0x23c] sm:$0xf]
        %v1028 = vld [vmem:[%s3] sm:$0xf]
        %v1173 = vunpack.c.l.b16 %v884
        %v1174 = vunpack.c.l.b16 %v885
        %v1175 = vunpack.c.l.b16 %v886
        %v1176 = vunpack.c.l.b16 %v887
        %v1177 = vunpack.c.l.b16 %v888
        %v1178 = vunpack.c.l.b16 %v889
        %v1179 = vunpack.c.l.b16 %v890
        %v1180 = vunpack.c.l.b16 %v891
        %v1181 = vunpack.c.l.b16 %v892
        %v1182 = vunpack.c.l.b16 %v893
        %v1183 = vunpack.c.l.b16 %v894
        %v1184 = vunpack.c.l.b16 %v895
        %v1185 = vunpack.c.l.b16 %v896
        %v1186 = vunpack.c.l.b16 %v897
        %v1187 = vunpack.c.l.b16 %v898
        %v1188 = vunpack.c.l.b16 %v899
        %v1189 = vunpack.c.l.b16 %v900
        %v1190 = vunpack.c.l.b16 %v901
        %v1191 = vunpack.c.l.b16 %v902
        %v1192 = vunpack.c.l.b16 %v903
        %v1193 = vunpack.c.l.b16 %v904
        %v1194 = vunpack.c.l.b16 %v905
        %v1195 = vunpack.c.l.b16 %v906
        %v1196 = vunpack.c.l.b16 %v907
        %v1197 = vunpack.c.l.b16 %v908
        %v1198 = vunpack.c.l.b16 %v909
        %v1199 = vunpack.c.l.b16 %v910
        %v1200 = vunpack.c.l.b16 %v911
        %v1201 = vunpack.c.l.b16 %v912
        %v1202 = vunpack.c.l.b16 %v913
        %v1203 = vunpack.c.l.b16 %v914
        %v1204 = vunpack.c.l.b16 %v915
        %v1205 = vunpack.c.l.b16 %v916
        %v1206 = vunpack.c.l.b16 %v917
        %v1207 = vunpack.c.l.b16 %v918
        %v1208 = vunpack.c.l.b16 %v919
        %v1209 = vunpack.c.l.b16 %v920
        %v1210 = vunpack.c.l.b16 %v921
        %v1211 = vunpack.c.l.b16 %v922
        %v1212 = vunpack.c.l.b16 %v923
        %v1213 = vunpack.c.l.b16 %v924
        %v1214 = vunpack.c.l.b16 %v925
        %v1215 = vunpack.c.l.b16 %v926
        %v1216 = vunpack.c.l.b16 %v927
        %v1217 = vunpack.c.l.b16 %v928
        %v1218 = vunpack.c.l.b16 %v929
        %v1219 = vunpack.c.l.b16 %v930
        %v1220 = vunpack.c.l.b16 %v931
        %v1221 = vunpack.c.l.b16 %v932
        %v1222 = vunpack.c.l.b16 %v933
        %v1223 = vunpack.c.l.b16 %v934
        %v1224 = vunpack.c.l.b16 %v935
        %v1225 = vunpack.c.l.b16 %v936
        %v1226 = vunpack.c.l.b16 %v937
        %v1227 = vunpack.c.l.b16 %v938
        %v1228 = vunpack.c.l.b16 %v939
        %v1229 = vunpack.c.l.b16 %v940
        %v1230 = vunpack.c.l.b16 %v941
        %v1231 = vunpack.c.l.b16 %v942
        %v1232 = vunpack.c.l.b16 %v943
        %v1233 = vunpack.c.l.b16 %v944
        %v1234 = vunpack.c.l.b16 %v945
        %v1235 = vunpack.c.l.b16 %v946
        %v1236 = vunpack.c.l.b16 %v947
        %v1237 = vunpack.c.l.b16 %v948
        %v1238 = vunpack.c.l.b16 %v949
        %v1239 = vunpack.c.l.b16 %v950
        %v1240 = vunpack.c.l.b16 %v951
        %v1241 = vunpack.c.l.b16 %v952
        %v1242 = vunpack.c.l.b16 %v953
        %v1243 = vunpack.c.l.b16 %v954
        %v1244 = vunpack.c.l.b16 %v955
        %v1245 = vunpack.c.l.b16 %v956
        %v1246 = vunpack.c.l.b16 %v957
        %v1247 = vunpack.c.l.b16 %v958
        %v1248 = vunpack.c.l.b16 %v959
        %v1249 = vunpack.c.l.b16 %v960
        %v1250 = vunpack.c.l.b16 %v961
        %v1251 = vunpack.c.l.b16 %v962
        %v1252 = vunpack.c.l.b16 %v963
        %v1253 = vunpack.c.l.b16 %v964
        %v1254 = vunpack.c.l.b16 %v965
        %v1255 = vunpack.c.l.b16 %v966
        %v1256 = vunpack.c.l.b16 %v967
        %v1257 = vunpack.c.l.b16 %v968
        %v1258 = vunpack.c.l.b16 %v969
        %v1259 = vunpack.c.l.b16 %v970
        %v1260 = vunpack.c.l.b16 %v971
        %v1261 = vunpack.c.l.b16 %v972
        %v1262 = vunpack.c.l.b16 %v973
        %v1263 = vunpack.c.l.b16 %v974
        %v1264 = vunpack.c.l.b16 %v975
        %v1265 = vunpack.c.l.b16 %v976
        %v1266 = vunpack.c.l.b16 %v977
        %v1267 = vunpack.c.l.b16 %v978
        %v1268 = vunpack.c.l.b16 %v979
        %v1269 = vunpack.c.l.b16 %v980
        %v1270 = vunpack.c.l.b16 %v981
        %v1271 = vunpack.c.l.b16 %v982
        %v1272 = vunpack.c.l.b16 %v983
        %v1273 = vunpack.c.l.b16 %v984
        %v1274 = vunpack.c.l.b16 %v985
        %v1275 = vunpack.c.l.b16 %v986
        %v1276 = vunpack.c.l.b16 %v987
        %v1277 = vunpack.c.l.b16 %v988
        %v1278 = vunpack.c.l.b16 %v989
        %v1279 = vunpack.c.l.b16 %v990
        %v1280 = vunpack.c.l.b16 %v991
        %v1281 = vunpack.c.l.b16 %v992
        %v1282 = vunpack.c.l.b16 %v993
        %v1283 = vunpack.c.l.b16 %v994
        %v1284 = vunpack.c.l.b16 %v995
        %v1285 = vunpack.c.l.b16 %v996
        %v1286 = vunpack.c.l.b16 %v997
        %v1287 = vunpack.c.l.b16 %v998
        %v1288 = vunpack.c.l.b16 %v999
        %v1289 = vunpack.c.l.b16 %v1000
        %v1290 = vunpack.c.l.b16 %v1001
        %v1291 = vunpack.c.l.b16 %v1002
        %v1292 = vunpack.c.l.b16 %v1003
        %v1293 = vunpack.c.l.b16 %v1004
        %v1294 = vunpack.c.l.b16 %v1005
        %v1295 = vunpack.c.l.b16 %v1006
        %v1296 = vunpack.c.l.b16 %v1007
        %v1297 = vunpack.c.l.b16 %v1008
        %v1298 = vunpack.c.l.b16 %v1009
        %v1299 = vunpack.c.l.b16 %v1010
        %v1300 = vunpack.c.l.b16 %v1011
        %v1301 = vunpack.c.l.b16 %v1012
        %v1302 = vunpack.c.l.b16 %v1013
        %v1303 = vunpack.c.l.b16 %v1014
        %v1304 = vunpack.c.l.b16 %v1015
        %v1305 = vunpack.c.l.b16 %v1016
        %v1306 = vunpack.c.l.b16 %v1017
        %v1307 = vunpack.c.l.b16 %v1018
        %v1308 = vunpack.c.l.b16 %v1019
        %v1309 = vunpack.c.l.b16 %v1020
        %v1310 = vunpack.c.l.b16 %v1021
        %v1311 = vunpack.c.l.b16 %v1022
        %v1312 = vunpack.c.l.b16 %v1023
        %v1313 = vunpack.c.l.b16 %v1024
        %v1314 = vunpack.c.l.b16 %v1025
        %v1315 = vunpack.c.l.b16 %v1026
        %v1316 = vunpack.c.l.b16 %v1027
        %v1317 = vpack.c.b16 %v1174, %v1173
        %v1318 = vpack.c.b16 %v1176, %v1175
        %v1319 = vpack.c.b16 %v1178, %v1177
        %v1320 = vpack.c.b16 %v1180, %v1179
        %v1321 = vpack.c.b16 %v1182, %v1181
        %v1322 = vpack.c.b16 %v1184, %v1183
        %v1323 = vpack.c.b16 %v1186, %v1185
        %v1324 = vpack.c.b16 %v1188, %v1187
        %v1325 = vpack.c.b16 %v1190, %v1189
        %v1326 = vpack.c.b16 %v1192, %v1191
        %v1327 = vpack.c.b16 %v1194, %v1193
        %v1328 = vpack.c.b16 %v1196, %v1195
        %v1329 = vpack.c.b16 %v1198, %v1197
        %v1330 = vpack.c.b16 %v1200, %v1199
        %v1331 = vpack.c.b16 %v1202, %v1201
        %v1332 = vpack.c.b16 %v1204, %v1203
        %v1333 = vpack.c.b16 %v1206, %v1205
        %v1334 = vpack.c.b16 %v1208, %v1207
        %v1335 = vpack.c.b16 %v1210, %v1209
        %v1336 = vpack.c.b16 %v1212, %v1211
        %v1337 = vpack.c.b16 %v1214, %v1213
        %v1338 = vpack.c.b16 %v1216, %v1215
        %v1339 = vpack.c.b16 %v1218, %v1217
        %v1340 = vpack.c.b16 %v1220, %v1219
        %v1341 = vpack.c.b16 %v1222, %v1221
        %v1342 = vpack.c.b16 %v1224, %v1223
        %v1343 = vpack.c.b16 %v1226, %v1225
        %v1344 = vpack.c.b16 %v1228, %v1227
        %v1345 = vpack.c.b16 %v1230, %v1229
        %v1346 = vpack.c.b16 %v1232, %v1231
        %v1347 = vpack.c.b16 %v1234, %v1233
        %v1348 = vpack.c.b16 %v1236, %v1235
        %v1349 = vpack.c.b16 %v1238, %v1237
        %v1350 = vpack.c.b16 %v1240, %v1239
        %v1351 = vpack.c.b16 %v1242, %v1241
        %v1352 = vpack.c.b16 %v1244, %v1243
        %v1353 = vpack.c.b16 %v1246, %v1245
        %v1354 = vpack.c.b16 %v1248, %v1247
        %v1355 = vpack.c.b16 %v1250, %v1249
        %v1356 = vpack.c.b16 %v1252, %v1251
        %v1357 = vpack.c.b16 %v1254, %v1253
        %v1358 = vpack.c.b16 %v1256, %v1255
        %v1359 = vpack.c.b16 %v1258, %v1257
        %v1360 = vpack.c.b16 %v1260, %v1259
        %v1361 = vpack.c.b16 %v1262, %v1261
        %v1362 = vpack.c.b16 %v1264, %v1263
        %v1363 = vpack.c.b16 %v1266, %v1265
        %v1364 = vpack.c.b16 %v1268, %v1267
        %v1365 = vpack.c.b16 %v1270, %v1269
        %v1366 = vpack.c.b16 %v1272, %v1271
        %v1367 = vpack.c.b16 %v1274, %v1273
        %v1368 = vpack.c.b16 %v1276, %v1275
        %v1369 = vpack.c.b16 %v1278, %v1277
        %v1370 = vpack.c.b16 %v1280, %v1279
        %v1371 = vpack.c.b16 %v1282, %v1281
        %v1372 = vpack.c.b16 %v1284, %v1283
        %v1373 = vpack.c.b16 %v1286, %v1285
        %v1374 = vpack.c.b16 %v1288, %v1287
        %v1375 = vpack.c.b16 %v1290, %v1289
        %v1376 = vpack.c.b16 %v1292, %v1291
        %v1377 = vpack.c.b16 %v1294, %v1293
        %v1378 = vpack.c.b16 %v1296, %v1295
        %v1379 = vpack.c.b16 %v1298, %v1297
        %v1380 = vpack.c.b16 %v1300, %v1299
        %v1381 = vpack.c.b16 %v1302, %v1301
        %v1382 = vpack.c.b16 %v1304, %v1303
        %v1383 = vpack.c.b16 %v1306, %v1305
        %v1384 = vpack.c.b16 %v1308, %v1307
        %v1385 = vpack.c.b16 %v1310, %v1309
        %v1386 = vpack.c.b16 %v1312, %v1311
        %v1387 = vpack.c.b16 %v1314, %v1313
        %v1388 = vpack.c.b16 %v1316, %v1315
        %vm1389 = vcmask 64512
        %v1391 = vsel %vm1389, %v1317, 0
        %v1394 = vsel %vm1389, %v1318, 0
        %v1397 = vsel %vm1389, %v1319, 0
        %v1400 = vsel %vm1389, %v1320, 0
        %v1403 = vsel %vm1389, %v1321, 0
        %v1406 = vsel %vm1389, %v1322, 0
        %v1409 = vsel %vm1389, %v1323, 0
        %v1412 = vsel %vm1389, %v1324, 0
        %v1415 = vsel %vm1389, %v1325, 0
        %v1418 = vsel %vm1389, %v1326, 0
        %v1421 = vsel %vm1389, %v1327, 0
        %v1424 = vsel %vm1389, %v1328, 0
        %v1427 = vsel %vm1389, %v1329, 0
        %v1430 = vsel %vm1389, %v1330, 0
        %v1433 = vsel %vm1389, %v1331, 0
        %v1436 = vsel %vm1389, %v1332, 0
        %v1439 = vsel %vm1389, %v1333, 0
        %v1442 = vsel %vm1389, %v1334, 0
        %v1445 = vsel %vm1389, %v1335, 0
        %v1448 = vsel %vm1389, %v1336, 0
        %v1451 = vsel %vm1389, %v1337, 0
        %v1454 = vsel %vm1389, %v1338, 0
        %v1457 = vsel %vm1389, %v1339, 0
        %v1460 = vsel %vm1389, %v1340, 0
        %v1463 = vsel %vm1389, %v1341, 0
        %v1466 = vsel %vm1389, %v1342, 0
        %v1469 = vsel %vm1389, %v1343, 0
        %v1472 = vsel %vm1389, %v1344, 0
        %v1475 = vsel %vm1389, %v1345, 0
        %v1478 = vsel %vm1389, %v1346, 0
        %v1481 = vsel %vm1389, %v1347, 0
        %v1484 = vsel %vm1389, %v1348, 0
        %v1487 = vsel %vm1389, %v1349, 0
        %v1490 = vsel %vm1389, %v1350, 0
        %v1493 = vsel %vm1389, %v1351, 0
        %v1496 = vsel %vm1389, %v1352, 0
        %v1499 = vsel %vm1389, %v1353, 0
        %v1502 = vsel %vm1389, %v1354, 0
        %v1505 = vsel %vm1389, %v1355, 0
        %v1508 = vsel %vm1389, %v1356, 0
        %v1511 = vsel %vm1389, %v1357, 0
        %v1514 = vsel %vm1389, %v1358, 0
        %v1517 = vsel %vm1389, %v1359, 0
        %v1520 = vsel %vm1389, %v1360, 0
        %v1523 = vsel %vm1389, %v1361, 0
        %v1526 = vsel %vm1389, %v1362, 0
        %v1529 = vsel %vm1389, %v1363, 0
        %v1532 = vsel %vm1389, %v1364, 0
        %v1535 = vsel %vm1389, %v1365, 0
        %v1538 = vsel %vm1389, %v1366, 0
        %v1541 = vsel %vm1389, %v1367, 0
        %v1544 = vsel %vm1389, %v1368, 0
        %v1547 = vsel %vm1389, %v1369, 0
        %v1550 = vsel %vm1389, %v1370, 0
        %v1553 = vsel %vm1389, %v1371, 0
        %v1556 = vsel %vm1389, %v1372, 0
        %v1559 = vsel %vm1389, %v1373, 0
        %v1562 = vsel %vm1389, %v1374, 0
        %v1565 = vsel %vm1389, %v1375, 0
        %v1568 = vsel %vm1389, %v1376, 0
        %v1571 = vsel %vm1389, %v1377, 0
        %v1574 = vsel %vm1389, %v1378, 0
        %v1577 = vsel %vm1389, %v1379, 0
        %v1580 = vsel %vm1389, %v1380, 0
        %v1583 = vsel %vm1389, %v1381, 0
        %v1586 = vsel %vm1389, %v1382, 0
        %v1589 = vsel %vm1389, %v1383, 0
        %v1592 = vsel %vm1389, %v1384, 0
        %v1595 = vsel %vm1389, %v1385, 0
        %v1598 = vsel %vm1389, %v1386, 0
        %v1601 = vsel %vm1389, %v1387, 0
        %v1604 = vsel %vm1389, %v1388, 0
        %vm1606 = vcmask 1043456
        %v1608 = vsel %vm1606, %v1028, 0
        %1610 = vmatprep.subr.bf16.mxu0 0
        %1611 = vmatpush1.bf16.msra.mxu0 %v1608
        %1612 = vmatprep.subr.bf16.mxu0 0
        %1613 = vmatpush1.bf16.msra.mxu0 0
        %1614 = vmatprep.subr.bf16.mxu0 0
        %1615 = vmatpush1.bf16.msra.mxu0 0
        %1616 = vmatprep.subr.bf16.mxu0 0
        %1617 = vmatpush1.bf16.msra.mxu0 0
        %1618 = vmatprep.subr.bf16.mxu0 0
        %1619 = vmatpush1.bf16.msra.mxu0 0
        %1620 = vmatprep.subr.bf16.mxu0 0
        %1621 = vmatpush1.bf16.msra.mxu0 0
        %1622 = vmatprep.subr.bf16.mxu0 0
        %1623 = vmatpush1.bf16.msra.mxu0 0
        %1624 = vmatprep.subr.bf16.mxu0 0
        %1625 = vmatpush1.bf16.msra.mxu0 0
        %1626 = vmatprep.subr.bf16.mxu0 0
        %1627 = vmatpush1.bf16.msra.mxu0 0
        %1628 = vmatprep.subr.bf16.mxu0 0
        %1629 = vmatpush1.bf16.msra.mxu0 0
        %1630 = vmatprep.subr.bf16.mxu0 0
        %1631 = vmatpush1.bf16.msra.mxu0 0
        %1632 = vmatprep.subr.bf16.mxu0 0
        %1633 = vmatpush1.bf16.msra.mxu0 0
        %1634 = vmatprep.subr.bf16.mxu0 0
        %1635 = vmatpush1.bf16.msra.mxu0 0
        %1636 = vmatprep.subr.bf16.mxu0 0
        %1637 = vmatpush1.bf16.msra.mxu0 0
        %1638 = vmatprep.subr.bf16.mxu0 0
        %1639 = vmatpush1.bf16.msra.mxu0 0
        %1640 = vmatprep.subr.bf16.mxu0 0
        %1641 = vmatpush1.bf16.msra.mxu0 0
        %1642 = vmatprep.mubr.bf16.mxu0 0
        %1643 = vmatmul.mubr.bf16.gmra.mrb[0].mxu0 %v1391
        %v1644 = vpop.f32.mrb[0].mxu0
        %v1645 = vadd.f32 0.0, %v1644
        %v1646 = vpop.f32.mrb[0].mxu0
        %v1647 = vpop.f32.mrb[0].mxu0
        %v1648 = vadd.f32 0.0, %v1647
        %v1649 = vpop.f32.mrb[0].mxu0
        %1650 = vmatprep.mubr.bf16.mxu0 0
        %1651 = vmatmul.mubr.bf16.gmra.mrb[0].mxu0 %v1394
        %v1652 = vpop.f32.mrb[0].mxu0
        %v1653 = vadd.f32 0.0, %v1652
        %v1654 = vpop.f32.mrb[0].mxu0
        %v1655 = vpop.f32.mrb[0].mxu0
        %v1656 = vadd.f32 0.0, %v1655
        %v1657 = vpop.f32.mrb[0].mxu0
        %1658 = vmatprep.mubr.bf16.mxu0 0
        %1659 = vmatmul.mubr.bf16.gmra.mrb[0].mxu0 %v1397
        %v1660 = vpop.f32.mrb[0].mxu0
        %v1661 = vadd.f32 0.0, %v1660
        %v1662 = vpop.f32.mrb[0].mxu0
        %v1663 = vpop.f32.mrb[0].mxu0
        %v1664 = vadd.f32 0.0, %v1663
        %v1665 = vpop.f32.mrb[0].mxu0
        %1666 = vmatprep.mubr.bf16.mxu0 0
        %1667 = vmatmul.mubr.bf16.gmra.mrb[0].mxu0 %v1400
        %v1668 = vpop.f32.mrb[0].mxu0
        %v1669 = vadd.f32 0.0, %v1668
        %v1670 = vpop.f32.mrb[0].mxu0
        %v1671 = vpop.f32.mrb[0].mxu0
        %v1672 = vadd.f32 0.0, %v1671
        %v1673 = vpop.f32.mrb[0].mxu0
        %1674 = vmatprep.mubr.bf16.mxu0 0
        %1675 = vmatmul.mubr.bf16.gmra.mrb[0].mxu0 %v1403
        %v1676 = vpop.f32.mrb[0].mxu0
        %v1677 = vadd.f32 0.0, %v1676
        %v1678 = vpop.f32.mrb[0].mxu0
        %v1679 = vpop.f32.mrb[0].mxu0
        %v1680 = vadd.f32 0.0, %v1679
        %v1681 = vpop.f32.mrb[0].mxu0
        %1682 = vmatprep.mubr.bf16.mxu0 0
        %1683 = vmatmul.mubr.bf16.gmra.mrb[0].mxu0 %v1406
        %v1684 = vpop.f32.mrb[0].mxu0
        %v1685 = vadd.f32 0.0, %v1684
        %v1686 = vpop.f32.mrb[0].mxu0
        %v1687 = vpop.f32.mrb[0].mxu0
        %v1688 = vadd.f32 0.0, %v1687
        %v1689 = vpop.f32.mrb[0].mxu0
        %1690 = vmatprep.mubr.bf16.mxu0 0
        %1691 = vmatmul.mubr.bf16.gmra.mrb[0].mxu0 %v1409
        %v1692 = vpop.f32.mrb[0].mxu0
        %v1693 = vadd.f32 0.0, %v1692
        %v1694 = vpop.f32.mrb[0].mxu0
        %v1695 = vpop.f32.mrb[0].mxu0
        %v1696 = vadd.f32 0.0, %v1695
        %v1697 = vpop.f32.mrb[0].mxu0
        %1698 = vmatprep.mubr.bf16.mxu0 0
        %1699 = vmatmul.mubr.bf16.gmra.mrb[0].mxu0 %v1412
        %v1700 = vpop.f32.mrb[0].mxu0
        %v1701 = vadd.f32 0.0, %v1700
        %v1702 = vpop.f32.mrb[0].mxu0
        %v1703 = vpop.f32.mrb[0].mxu0
        %v1704 = vadd.f32 0.0, %v1703
        %v1705 = vpop.f32.mrb[0].mxu0
        %1706 = vmatprep.mubr.bf16.mxu0 0
        %1707 = vmatmul.mubr.bf16.gmra.mrb[0].mxu0 %v1415
        %v1708 = vpop.f32.mrb[0].mxu0
        %v1709 = vadd.f32 0.0, %v1708
        %v1710 = vpop.f32.mrb[0].mxu0
        %v1711 = vpop.f32.mrb[0].mxu0
        %v1712 = vadd.f32 0.0, %v1711
        %v1713 = vpop.f32.mrb[0].mxu0
        %1714 = vmatprep.mubr.bf16.mxu0 0
        %1715 = vmatmul.mubr.bf16.gmra.mrb[0].mxu0 %v1418
        %v1716 = vpop.f32.mrb[0].mxu0
        %v1717 = vadd.f32 0.0, %v1716
        %v1718 = vpop.f32.mrb[0].mxu0
        %v1719 = vpop.f32.mrb[0].mxu0
        %v1720 = vadd.f32 0.0, %v1719
        %v1721 = vpop.f32.mrb[0].mxu0
        %1722 = vmatprep.mubr.bf16.mxu0 0
        %1723 = vmatmul.mubr.bf16.gmra.mrb[0].mxu0 %v1421
        %v1724 = vpop.f32.mrb[0].mxu0
        %v1725 = vadd.f32 0.0, %v1724
        %v1726 = vpop.f32.mrb[0].mxu0
        %v1727 = vpop.f32.mrb[0].mxu0
        %v1728 = vadd.f32 0.0, %v1727
        %v1729 = vpop.f32.mrb[0].mxu0
        %1730 = vmatprep.mubr.bf16.mxu0 0
        %1731 = vmatmul.mubr.bf16.gmra.mrb[0].mxu0 %v1424
        %v1732 = vpop.f32.mrb[0].mxu0
        %v1733 = vadd.f32 0.0, %v1732
        %v1734 = vpop.f32.mrb[0].mxu0
        %v1735 = vpop.f32.mrb[0].mxu0
        %v1736 = vadd.f32 0.0, %v1735
        %v1737 = vpop.f32.mrb[0].mxu0
        %1738 = vmatprep.mubr.bf16.mxu0 0
        %1739 = vmatmul.mubr.bf16.gmra.mrb[0].mxu0 %v1427
        %v1740 = vpop.f32.mrb[0].mxu0
        %v1741 = vadd.f32 0.0, %v1740
        %v1742 = vpop.f32.mrb[0].mxu0
        %v1743 = vpop.f32.mrb[0].mxu0
        %v1744 = vadd.f32 0.0, %v1743
        %v1745 = vpop.f32.mrb[0].mxu0
        %1746 = vmatprep.mubr.bf16.mxu0 0
        %1747 = vmatmul.mubr.bf16.gmra.mrb[0].mxu0 %v1430
        %v1748 = vpop.f32.mrb[0].mxu0
        %v1749 = vadd.f32 0.0, %v1748
        %v1750 = vpop.f32.mrb[0].mxu0
        %v1751 = vpop.f32.mrb[0].mxu0
        %v1752 = vadd.f32 0.0, %v1751
        %v1753 = vpop.f32.mrb[0].mxu0
        %1754 = vmatprep.mubr.bf16.mxu0 0
        %1755 = vmatmul.mubr.bf16.gmra.mrb[0].mxu0 %v1433
        %v1756 = vpop.f32.mrb[0].mxu0
        %v1757 = vadd.f32 0.0, %v1756
        %v1758 = vpop.f32.mrb[0].mxu0
        %v1759 = vpop.f32.mrb[0].mxu0
        %v1760 = vadd.f32 0.0, %v1759
        %v1761 = vpop.f32.mrb[0].mxu0
        %1762 = vmatprep.mubr.bf16.mxu0 0
        %1763 = vmatmul.mubr.bf16.gmra.mrb[0].mxu0 %v1436
        %v1764 = vpop.f32.mrb[0].mxu0
        %v1765 = vadd.f32 0.0, %v1764
        %v1766 = vpop.f32.mrb[0].mxu0
        %v1767 = vpop.f32.mrb[0].mxu0
        %v1768 = vadd.f32 0.0, %v1767
        %v1769 = vpop.f32.mrb[0].mxu0
        %1770 = vmatprep.mubr.bf16.mxu0 0
        %1771 = vmatmul.mubr.bf16.gmra.mrb[0].mxu0 %v1439
        %v1772 = vpop.f32.mrb[0].mxu0
        %v1773 = vadd.f32 0.0, %v1772
        %v1774 = vpop.f32.mrb[0].mxu0
        %v1775 = vpop.f32.mrb[0].mxu0
        %v1776 = vadd.f32 0.0, %v1775
        %v1777 = vpop.f32.mrb[0].mxu0
        %1778 = vmatprep.mubr.bf16.mxu0 0
        %1779 = vmatmul.mubr.bf16.gmra.mrb[0].mxu0 %v1442
        %v1780 = vpop.f32.mrb[0].mxu0
        %v1781 = vadd.f32 0.0, %v1780
        %v1782 = vpop.f32.mrb[0].mxu0
        %v1783 = vpop.f32.mrb[0].mxu0
        %v1784 = vadd.f32 0.0, %v1783
        %v1785 = vpop.f32.mrb[0].mxu0
        %1786 = vmatprep.mubr.bf16.mxu0 0
        %1787 = vmatmul.mubr.bf16.gmra.mrb[0].mxu0 %v1445
        %v1788 = vpop.f32.mrb[0].mxu0
        %v1789 = vadd.f32 0.0, %v1788
        %v1790 = vpop.f32.mrb[0].mxu0
        %v1791 = vpop.f32.mrb[0].mxu0
        %v1792 = vadd.f32 0.0, %v1791
        %v1793 = vpop.f32.mrb[0].mxu0
        %1794 = vmatprep.mubr.bf16.mxu0 0
        %1795 = vmatmul.mubr.bf16.gmra.mrb[0].mxu0 %v1448
        %v1796 = vpop.f32.mrb[0].mxu0
        %v1797 = vadd.f32 0.0, %v1796
        %v1798 = vpop.f32.mrb[0].mxu0
        %v1799 = vpop.f32.mrb[0].mxu0
        %v1800 = vadd.f32 0.0, %v1799
        %v1801 = vpop.f32.mrb[0].mxu0
        %1802 = vmatprep.mubr.bf16.mxu0 0
        %1803 = vmatmul.mubr.bf16.gmra.mrb[0].mxu0 %v1451
        %v1804 = vpop.f32.mrb[0].mxu0
        %v1805 = vadd.f32 0.0, %v1804
        %v1806 = vpop.f32.mrb[0].mxu0
        %v1807 = vpop.f32.mrb[0].mxu0
        %v1808 = vadd.f32 0.0, %v1807
        %v1809 = vpop.f32.mrb[0].mxu0
        %1810 = vmatprep.mubr.bf16.mxu0 0
        %1811 = vmatmul.mubr.bf16.gmra.mrb[0].mxu0 %v1454
        %v1812 = vpop.f32.mrb[0].mxu0
        %v1813 = vadd.f32 0.0, %v1812
        %v1814 = vpop.f32.mrb[0].mxu0
        %v1815 = vpop.f32.mrb[0].mxu0
        %v1816 = vadd.f32 0.0, %v1815
        %v1817 = vpop.f32.mrb[0].mxu0
        %1818 = vmatprep.mubr.bf16.mxu0 0
        %1819 = vmatmul.mubr.bf16.gmra.mrb[0].mxu0 %v1457
        %v1820 = vpop.f32.mrb[0].mxu0
        %v1821 = vadd.f32 0.0, %v1820
        %v1822 = vpop.f32.mrb[0].mxu0
        %v1823 = vpop.f32.mrb[0].mxu0
        %v1824 = vadd.f32 0.0, %v1823
        %v1825 = vpop.f32.mrb[0].mxu0
        %1826 = vmatprep.mubr.bf16.mxu0 0
        %1827 = vmatmul.mubr.bf16.gmra.mrb[0].mxu0 %v1460
        %v1828 = vpop.f32.mrb[0].mxu0
        %v1829 = vadd.f32 0.0, %v1828
        %v1830 = vpop.f32.mrb[0].mxu0
        %v1831 = vpop.f32.mrb[0].mxu0
        %v1832 = vadd.f32 0.0, %v1831
        %v1833 = vpop.f32.mrb[0].mxu0
        %1834 = vmatprep.mubr.bf16.mxu0 0
        %1835 = vmatmul.mubr.bf16.gmra.mrb[0].mxu0 %v1463
        %v1836 = vpop.f32.mrb[0].mxu0
        %v1837 = vadd.f32 0.0, %v1836
        %v1838 = vpop.f32.mrb[0].mxu0
        %v1839 = vpop.f32.mrb[0].mxu0
        %v1840 = vadd.f32 0.0, %v1839
        %v1841 = vpop.f32.mrb[0].mxu0
        %1842 = vmatprep.mubr.bf16.mxu0 0
        %1843 = vmatmul.mubr.bf16.gmra.mrb[0].mxu0 %v1466
        %v1844 = vpop.f32.mrb[0].mxu0
        %v1845 = vadd.f32 0.0, %v1844
        %v1846 = vpop.f32.mrb[0].mxu0
        %v1847 = vpop.f32.mrb[0].mxu0
        %v1848 = vadd.f32 0.0, %v1847
        %v1849 = vpop.f32.mrb[0].mxu0
        %1850 = vmatprep.mubr.bf16.mxu0 0
        %1851 = vmatmul.mubr.bf16.gmra.mrb[0].mxu0 %v1469
        %v1852 = vpop.f32.mrb[0].mxu0
        %v1853 = vadd.f32 0.0, %v1852
        %v1854 = vpop.f32.mrb[0].mxu0
        %v1855 = vpop.f32.mrb[0].mxu0
        %v1856 = vadd.f32 0.0, %v1855
        %v1857 = vpop.f32.mrb[0].mxu0
        %1858 = vmatprep.mubr.bf16.mxu0 0
        %1859 = vmatmul.mubr.bf16.gmra.mrb[0].mxu0 %v1472
        %v1860 = vpop.f32.mrb[0].mxu0
        %v1861 = vadd.f32 0.0, %v1860
        %v1862 = vpop.f32.mrb[0].mxu0
        %v1863 = vpop.f32.mrb[0].mxu0
        %v1864 = vadd.f32 0.0, %v1863
        %v1865 = vpop.f32.mrb[0].mxu0
        %1866 = vmatprep.mubr.bf16.mxu0 0
        %1867 = vmatmul.mubr.bf16.gmra.mrb[0].mxu0 %v1475
        %v1868 = vpop.f32.mrb[0].mxu0
        %v1869 = vadd.f32 0.0, %v1868
        %v1870 = vpop.f32.mrb[0].mxu0
        %v1871 = vpop.f32.mrb[0].mxu0
        %v1872 = vadd.f32 0.0, %v1871
        %v1873 = vpop.f32.mrb[0].mxu0
        %1874 = vmatprep.mubr.bf16.mxu0 0
        %1875 = vmatmul.mubr.bf16.gmra.mrb[0].mxu0 %v1478
        %v1876 = vpop.f32.mrb[0].mxu0
        %v1877 = vadd.f32 0.0, %v1876
        %v1878 = vpop.f32.mrb[0].mxu0
        %v1879 = vpop.f32.mrb[0].mxu0
        %v1880 = vadd.f32 0.0, %v1879
        %v1881 = vpop.f32.mrb[0].mxu0
        %1882 = vmatprep.mubr.bf16.mxu0 0
        %1883 = vmatmul.mubr.bf16.gmra.mrb[0].mxu0 %v1481
        %v1884 = vpop.f32.mrb[0].mxu0
        %v1885 = vadd.f32 0.0, %v1884
        %v1886 = vpop.f32.mrb[0].mxu0
        %v1887 = vpop.f32.mrb[0].mxu0
        %v1888 = vadd.f32 0.0, %v1887
        %v1889 = vpop.f32.mrb[0].mxu0
        %1890 = vmatprep.mubr.bf16.mxu0 0
        %1891 = vmatmul.mubr.bf16.gmra.mrb[0].mxu0 %v1484
        %v1892 = vpop.f32.mrb[0].mxu0
        %v1893 = vadd.f32 0.0, %v1892
        %v1894 = vpop.f32.mrb[0].mxu0
        %v1895 = vpop.f32.mrb[0].mxu0
        %v1896 = vadd.f32 0.0, %v1895
        %v1897 = vpop.f32.mrb[0].mxu0
        %1898 = vmatprep.mubr.bf16.mxu0 0
        %1899 = vmatmul.mubr.bf16.gmra.mrb[0].mxu0 %v1487
        %v1900 = vpop.f32.mrb[0].mxu0
        %v1901 = vadd.f32 0.0, %v1900
        %v1902 = vpop.f32.mrb[0].mxu0
        %v1903 = vpop.f32.mrb[0].mxu0
        %v1904 = vadd.f32 0.0, %v1903
        %v1905 = vpop.f32.mrb[0].mxu0
        %1906 = vmatprep.mubr.bf16.mxu0 0
        %1907 = vmatmul.mubr.bf16.gmra.mrb[0].mxu0 %v1490
        %v1908 = vpop.f32.mrb[0].mxu0
        %v1909 = vadd.f32 0.0, %v1908
        %v1910 = vpop.f32.mrb[0].mxu0
        %v1911 = vpop.f32.mrb[0].mxu0
        %v1912 = vadd.f32 0.0, %v1911
        %v1913 = vpop.f32.mrb[0].mxu0
        %1914 = vmatprep.mubr.bf16.mxu0 0
        %1915 = vmatmul.mubr.bf16.gmra.mrb[0].mxu0 %v1493
        %v1916 = vpop.f32.mrb[0].mxu0
        %v1917 = vadd.f32 0.0, %v1916
        %v1918 = vpop.f32.mrb[0].mxu0
        %v1919 = vpop.f32.mrb[0].mxu0
        %v1920 = vadd.f32 0.0, %v1919
        %v1921 = vpop.f32.mrb[0].mxu0
        %1922 = vmatprep.mubr.bf16.mxu0 0
        %1923 = vmatmul.mubr.bf16.gmra.mrb[0].mxu0 %v1496
        %v1924 = vpop.f32.mrb[0].mxu0
        %v1925 = vadd.f32 0.0, %v1924
        %v1926 = vpop.f32.mrb[0].mxu0
        %v1927 = vpop.f32.mrb[0].mxu0
        %v1928 = vadd.f32 0.0, %v1927
        %v1929 = vpop.f32.mrb[0].mxu0
        %1930 = vmatprep.mubr.bf16.mxu0 0
        %1931 = vmatmul.mubr.bf16.gmra.mrb[0].mxu0 %v1499
        %v1932 = vpop.f32.mrb[0].mxu0
        %v1933 = vadd.f32 0.0, %v1932
        %v1934 = vpop.f32.mrb[0].mxu0
        %v1935 = vpop.f32.mrb[0].mxu0
        %v1936 = vadd.f32 0.0, %v1935
        %v1937 = vpop.f32.mrb[0].mxu0
        %1938 = vmatprep.mubr.bf16.mxu0 0
        %1939 = vmatmul.mubr.bf16.gmra.mrb[0].mxu0 %v1502
        %v1940 = vpop.f32.mrb[0].mxu0
        %v1941 = vadd.f32 0.0, %v1940
        %v1942 = vpop.f32.mrb[0].mxu0
        %v1943 = vpop.f32.mrb[0].mxu0
        %v1944 = vadd.f32 0.0, %v1943
        %v1945 = vpop.f32.mrb[0].mxu0
        %1946 = vmatprep.mubr.bf16.mxu0 0
        %1947 = vmatmul.mubr.bf16.gmra.mrb[0].mxu0 %v1505
        %v1948 = vpop.f32.mrb[0].mxu0
        %v1949 = vadd.f32 0.0, %v1948
        %v1950 = vpop.f32.mrb[0].mxu0
        %v1951 = vpop.f32.mrb[0].mxu0
        %v1952 = vadd.f32 0.0, %v1951
        %v1953 = vpop.f32.mrb[0].mxu0
        %1954 = vmatprep.mubr.bf16.mxu0 0
        %1955 = vmatmul.mubr.bf16.gmra.mrb[0].mxu0 %v1508
        %v1956 = vpop.f32.mrb[0].mxu0
        %v1957 = vadd.f32 0.0, %v1956
        %v1958 = vpop.f32.mrb[0].mxu0
        %v1959 = vpop.f32.mrb[0].mxu0
        %v1960 = vadd.f32 0.0, %v1959
        %v1961 = vpop.f32.mrb[0].mxu0
        %1962 = vmatprep.mubr.bf16.mxu0 0
        %1963 = vmatmul.mubr.bf16.gmra.mrb[0].mxu0 %v1511
        %v1964 = vpop.f32.mrb[0].mxu0
        %v1965 = vadd.f32 0.0, %v1964
        %v1966 = vpop.f32.mrb[0].mxu0
        %v1967 = vpop.f32.mrb[0].mxu0
        %v1968 = vadd.f32 0.0, %v1967
        %v1969 = vpop.f32.mrb[0].mxu0
        %1970 = vmatprep.mubr.bf16.mxu0 0
        %1971 = vmatmul.mubr.bf16.gmra.mrb[0].mxu0 %v1514
        %v1972 = vpop.f32.mrb[0].mxu0
        %v1973 = vadd.f32 0.0, %v1972
        %v1974 = vpop.f32.mrb[0].mxu0
        %v1975 = vpop.f32.mrb[0].mxu0
        %v1976 = vadd.f32 0.0, %v1975
        %v1977 = vpop.f32.mrb[0].mxu0
        %1978 = vmatprep.mubr.bf16.mxu0 0
        %1979 = vmatmul.mubr.bf16.gmra.mrb[0].mxu0 %v1517
        %v1980 = vpop.f32.mrb[0].mxu0
        %v1981 = vadd.f32 0.0, %v1980
        %v1982 = vpop.f32.mrb[0].mxu0
        %v1983 = vpop.f32.mrb[0].mxu0
        %v1984 = vadd.f32 0.0, %v1983
        %v1985 = vpop.f32.mrb[0].mxu0
        %1986 = vmatprep.mubr.bf16.mxu0 0
        %1987 = vmatmul.mubr.bf16.gmra.mrb[0].mxu0 %v1520
        %v1988 = vpop.f32.mrb[0].mxu0
        %v1989 = vadd.f32 0.0, %v1988
        %v1990 = vpop.f32.mrb[0].mxu0
        %v1991 = vpop.f32.mrb[0].mxu0
        %v1992 = vadd.f32 0.0, %v1991
        %v1993 = vpop.f32.mrb[0].mxu0
        %1994 = vmatprep.mubr.bf16.mxu0 0
        %1995 = vmatmul.mubr.bf16.gmra.mrb[0].mxu0 %v1523
        %v1996 = vpop.f32.mrb[0].mxu0
        %v1997 = vadd.f32 0.0, %v1996
        %v1998 = vpop.f32.mrb[0].mxu0
        %v1999 = vpop.f32.mrb[0].mxu0
        %v2000 = vadd.f32 0.0, %v1999
        %v2001 = vpop.f32.mrb[0].mxu0
        %2002 = vmatprep.mubr.bf16.mxu0 0
        %2003 = vmatmul.mubr.bf16.gmra.mrb[0].mxu0 %v1526
        %v2004 = vpop.f32.mrb[0].mxu0
        %v2005 = vadd.f32 0.0, %v2004
        %v2006 = vpop.f32.mrb[0].mxu0
        %v2007 = vpop.f32.mrb[0].mxu0
        %v2008 = vadd.f32 0.0, %v2007
        %v2009 = vpop.f32.mrb[0].mxu0
        %2010 = vmatprep.mubr.bf16.mxu0 0
        %2011 = vmatmul.mubr.bf16.gmra.mrb[0].mxu0 %v1529
        %v2012 = vpop.f32.mrb[0].mxu0
        %v2013 = vadd.f32 0.0, %v2012
        %v2014 = vpop.f32.mrb[0].mxu0
        %v2015 = vpop.f32.mrb[0].mxu0
        %v2016 = vadd.f32 0.0, %v2015
        %v2017 = vpop.f32.mrb[0].mxu0
        %2018 = vmatprep.mubr.bf16.mxu0 0
        %2019 = vmatmul.mubr.bf16.gmra.mrb[0].mxu0 %v1532
        %v2020 = vpop.f32.mrb[0].mxu0
        %v2021 = vadd.f32 0.0, %v2020
        %v2022 = vpop.f32.mrb[0].mxu0
        %v2023 = vpop.f32.mrb[0].mxu0
        %v2024 = vadd.f32 0.0, %v2023
        %v2025 = vpop.f32.mrb[0].mxu0
        %2026 = vmatprep.mubr.bf16.mxu0 0
        %2027 = vmatmul.mubr.bf16.gmra.mrb[0].mxu0 %v1535
        %v2028 = vpop.f32.mrb[0].mxu0
        %v2029 = vadd.f32 0.0, %v2028
        %v2030 = vpop.f32.mrb[0].mxu0
        %v2031 = vpop.f32.mrb[0].mxu0
        %v2032 = vadd.f32 0.0, %v2031
        %v2033 = vpop.f32.mrb[0].mxu0
        %2034 = vmatprep.mubr.bf16.mxu0 0
        %2035 = vmatmul.mubr.bf16.gmra.mrb[0].mxu0 %v1538
        %v2036 = vpop.f32.mrb[0].mxu0
        %v2037 = vadd.f32 0.0, %v2036
        %v2038 = vpop.f32.mrb[0].mxu0
        %v2039 = vpop.f32.mrb[0].mxu0
        %v2040 = vadd.f32 0.0, %v2039
        %v2041 = vpop.f32.mrb[0].mxu0
        %2042 = vmatprep.mubr.bf16.mxu0 0
        %2043 = vmatmul.mubr.bf16.gmra.mrb[0].mxu0 %v1541
        %v2044 = vpop.f32.mrb[0].mxu0
        %v2045 = vadd.f32 0.0, %v2044
        %v2046 = vpop.f32.mrb[0].mxu0
        %v2047 = vpop.f32.mrb[0].mxu0
        %v2048 = vadd.f32 0.0, %v2047
        %v2049 = vpop.f32.mrb[0].mxu0
        %2050 = vmatprep.mubr.bf16.mxu0 0
        %2051 = vmatmul.mubr.bf16.gmra.mrb[0].mxu0 %v1544
        %v2052 = vpop.f32.mrb[0].mxu0
        %v2053 = vadd.f32 0.0, %v2052
        %v2054 = vpop.f32.mrb[0].mxu0
        %v2055 = vpop.f32.mrb[0].mxu0
        %v2056 = vadd.f32 0.0, %v2055
        %v2057 = vpop.f32.mrb[0].mxu0
        %2058 = vmatprep.mubr.bf16.mxu0 0
        %2059 = vmatmul.mubr.bf16.gmra.mrb[0].mxu0 %v1547
        %v2060 = vpop.f32.mrb[0].mxu0
        %v2061 = vadd.f32 0.0, %v2060
        %v2062 = vpop.f32.mrb[0].mxu0
        %v2063 = vpop.f32.mrb[0].mxu0
        %v2064 = vadd.f32 0.0, %v2063
        %v2065 = vpop.f32.mrb[0].mxu0
        %2066 = vmatprep.mubr.bf16.mxu0 0
        %2067 = vmatmul.mubr.bf16.gmra.mrb[0].mxu0 %v1550
        %v2068 = vpop.f32.mrb[0].mxu0
        %v2069 = vadd.f32 0.0, %v2068
        %v2070 = vpop.f32.mrb[0].mxu0
        %v2071 = vpop.f32.mrb[0].mxu0
        %v2072 = vadd.f32 0.0, %v2071
        %v2073 = vpop.f32.mrb[0].mxu0
        %2074 = vmatprep.mubr.bf16.mxu0 0
        %2075 = vmatmul.mubr.bf16.gmra.mrb[0].mxu0 %v1553
        %v2076 = vpop.f32.mrb[0].mxu0
        %v2077 = vadd.f32 0.0, %v2076
        %v2078 = vpop.f32.mrb[0].mxu0
        %v2079 = vpop.f32.mrb[0].mxu0
        %v2080 = vadd.f32 0.0, %v2079
        %v2081 = vpop.f32.mrb[0].mxu0
        %2082 = vmatprep.mubr.bf16.mxu0 0
        %2083 = vmatmul.mubr.bf16.gmra.mrb[0].mxu0 %v1556
        %v2084 = vpop.f32.mrb[0].mxu0
        %v2085 = vadd.f32 0.0, %v2084
        %v2086 = vpop.f32.mrb[0].mxu0
        %v2087 = vpop.f32.mrb[0].mxu0
        %v2088 = vadd.f32 0.0, %v2087
        %v2089 = vpop.f32.mrb[0].mxu0
        %2090 = vmatprep.mubr.bf16.mxu0 0
        %2091 = vmatmul.mubr.bf16.gmra.mrb[0].mxu0 %v1559
        %v2092 = vpop.f32.mrb[0].mxu0
        %v2093 = vadd.f32 0.0, %v2092
        %v2094 = vpop.f32.mrb[0].mxu0
        %v2095 = vpop.f32.mrb[0].mxu0
        %v2096 = vadd.f32 0.0, %v2095
        %v2097 = vpop.f32.mrb[0].mxu0
        %2098 = vmatprep.mubr.bf16.mxu0 0
        %2099 = vmatmul.mubr.bf16.gmra.mrb[0].mxu0 %v1562
        %v2100 = vpop.f32.mrb[0].mxu0
        %v2101 = vadd.f32 0.0, %v2100
        %v2102 = vpop.f32.mrb[0].mxu0
        %v2103 = vpop.f32.mrb[0].mxu0
        %v2104 = vadd.f32 0.0, %v2103
        %v2105 = vpop.f32.mrb[0].mxu0
        %2106 = vmatprep.mubr.bf16.mxu0 0
        %2107 = vmatmul.mubr.bf16.gmra.mrb[0].mxu0 %v1565
        %v2108 = vpop.f32.mrb[0].mxu0
        %v2109 = vadd.f32 0.0, %v2108
        %v2110 = vpop.f32.mrb[0].mxu0
        %v2111 = vpop.f32.mrb[0].mxu0
        %v2112 = vadd.f32 0.0, %v2111
        %v2113 = vpop.f32.mrb[0].mxu0
        %2114 = vmatprep.mubr.bf16.mxu0 0
        %2115 = vmatmul.mubr.bf16.gmra.mrb[0].mxu0 %v1568
        %v2116 = vpop.f32.mrb[0].mxu0
        %v2117 = vadd.f32 0.0, %v2116
        %v2118 = vpop.f32.mrb[0].mxu0
        %v2119 = vpop.f32.mrb[0].mxu0
        %v2120 = vadd.f32 0.0, %v2119
        %v2121 = vpop.f32.mrb[0].mxu0
        %2122 = vmatprep.mubr.bf16.mxu0 0
        %2123 = vmatmul.mubr.bf16.gmra.mrb[0].mxu0 %v1571
        %v2124 = vpop.f32.mrb[0].mxu0
        %v2125 = vadd.f32 0.0, %v2124
        %v2126 = vpop.f32.mrb[0].mxu0
        %v2127 = vpop.f32.mrb[0].mxu0
        %v2128 = vadd.f32 0.0, %v2127
        %v2129 = vpop.f32.mrb[0].mxu0
        %2130 = vmatprep.mubr.bf16.mxu0 0
        %2131 = vmatmul.mubr.bf16.gmra.mrb[0].mxu0 %v1574
        %v2132 = vpop.f32.mrb[0].mxu0
        %v2133 = vadd.f32 0.0, %v2132
        %v2134 = vpop.f32.mrb[0].mxu0
        %v2135 = vpop.f32.mrb[0].mxu0
        %v2136 = vadd.f32 0.0, %v2135
        %v2137 = vpop.f32.mrb[0].mxu0
        %2138 = vmatprep.mubr.bf16.mxu0 0
        %2139 = vmatmul.mubr.bf16.gmra.mrb[0].mxu0 %v1577
        %v2140 = vpop.f32.mrb[0].mxu0
        %v2141 = vadd.f32 0.0, %v2140
        %v2142 = vpop.f32.mrb[0].mxu0
        %v2143 = vpop.f32.mrb[0].mxu0
        %v2144 = vadd.f32 0.0, %v2143
        %v2145 = vpop.f32.mrb[0].mxu0
        %2146 = vmatprep.mubr.bf16.mxu0 0
        %2147 = vmatmul.mubr.bf16.gmra.mrb[0].mxu0 %v1580
        %v2148 = vpop.f32.mrb[0].mxu0
        %v2149 = vadd.f32 0.0, %v2148
        %v2150 = vpop.f32.mrb[0].mxu0
        %v2151 = vpop.f32.mrb[0].mxu0
        %v2152 = vadd.f32 0.0, %v2151
        %v2153 = vpop.f32.mrb[0].mxu0
        %2154 = vmatprep.mubr.bf16.mxu0 0
        %2155 = vmatmul.mubr.bf16.gmra.mrb[0].mxu0 %v1583
        %v2156 = vpop.f32.mrb[0].mxu0
        %v2157 = vadd.f32 0.0, %v2156
        %v2158 = vpop.f32.mrb[0].mxu0
        %v2159 = vpop.f32.mrb[0].mxu0
        %v2160 = vadd.f32 0.0, %v2159
        %v2161 = vpop.f32.mrb[0].mxu0
        %2162 = vmatprep.mubr.bf16.mxu0 0
        %2163 = vmatmul.mubr.bf16.gmra.mrb[0].mxu0 %v1586
        %v2164 = vpop.f32.mrb[0].mxu0
        %v2165 = vadd.f32 0.0, %v2164
        %v2166 = vpop.f32.mrb[0].mxu0
        %v2167 = vpop.f32.mrb[0].mxu0
        %v2168 = vadd.f32 0.0, %v2167
        %v2169 = vpop.f32.mrb[0].mxu0
        %2170 = vmatprep.mubr.bf16.mxu0 0
        %2171 = vmatmul.mubr.bf16.gmra.mrb[0].mxu0 %v1589
        %v2172 = vpop.f32.mrb[0].mxu0
        %v2173 = vadd.f32 0.0, %v2172
        %v2174 = vpop.f32.mrb[0].mxu0
        %v2175 = vpop.f32.mrb[0].mxu0
        %v2176 = vadd.f32 0.0, %v2175
        %v2177 = vpop.f32.mrb[0].mxu0
        %2178 = vmatprep.mubr.bf16.mxu0 0
        %2179 = vmatmul.mubr.bf16.gmra.mrb[0].mxu0 %v1592
        %v2180 = vpop.f32.mrb[0].mxu0
        %v2181 = vadd.f32 0.0, %v2180
        %v2182 = vpop.f32.mrb[0].mxu0
        %v2183 = vpop.f32.mrb[0].mxu0
        %v2184 = vadd.f32 0.0, %v2183
        %v2185 = vpop.f32.mrb[0].mxu0
        %2186 = vmatprep.mubr.bf16.mxu0 0
        %2187 = vmatmul.mubr.bf16.gmra.mrb[0].mxu0 %v1595
        %v2188 = vpop.f32.mrb[0].mxu0
        %v2189 = vadd.f32 0.0, %v2188
        %v2190 = vpop.f32.mrb[0].mxu0
        %v2191 = vpop.f32.mrb[0].mxu0
        %v2192 = vadd.f32 0.0, %v2191
        %v2193 = vpop.f32.mrb[0].mxu0
        %2194 = vmatprep.mubr.bf16.mxu0 0
        %2195 = vmatmul.mubr.bf16.gmra.mrb[0].mxu0 %v1598
        %v2196 = vpop.f32.mrb[0].mxu0
        %v2197 = vadd.f32 0.0, %v2196
        %v2198 = vpop.f32.mrb[0].mxu0
        %v2199 = vpop.f32.mrb[0].mxu0
        %v2200 = vadd.f32 0.0, %v2199
        %v2201 = vpop.f32.mrb[0].mxu0
        %2202 = vmatprep.mubr.bf16.mxu0 0
        %2203 = vmatmul.mubr.bf16.gmra.mrb[0].mxu0 %v1601
        %v2204 = vpop.f32.mrb[0].mxu0
        %v2205 = vadd.f32 0.0, %v2204
        %v2206 = vpop.f32.mrb[0].mxu0
        %v2207 = vpop.f32.mrb[0].mxu0
        %v2208 = vadd.f32 0.0, %v2207
        %v2209 = vpop.f32.mrb[0].mxu0
        %2210 = vmatprep.mubr.bf16.mxu0 0
        %2211 = vmatmul.mubr.bf16.gmra.mrb[0].mxu0 %v1604
        %v2212 = vpop.f32.mrb[0].mxu0
        %v2213 = vadd.f32 0.0, %v2212
        %v2214 = vpop.f32.mrb[0].mxu0
        %v2215 = vpop.f32.mrb[0].mxu0
        %v2216 = vadd.f32 0.0, %v2215
        %v2217 = vpop.f32.mrb[0].mxu0
        %2218 = vdwg.mxu0
        %v2219 = vmax.f32 %v1645, %v1709
        %v2220 = vmax.f32 %v2219, %v1773
        %v2221 = vmax.f32 %v2220, %v1837
        %v2222 = vmax.f32 %v2221, %v1901
        %v2223 = vmax.f32 %v2222, %v1965
        %v2224 = vmax.f32 %v2223, %v2029
        %v2225 = vmax.f32 %v2224, %v2093
        %v2226 = vmax.f32 %v2225, %v2157
        %v2227 = vmax.f32 %v1648, %v1712
        %v2228 = vmax.f32 %v2227, %v1776
        %v2229 = vmax.f32 %v2228, %v1840
        %v2230 = vmax.f32 %v2229, %v1904
        %v2231 = vmax.f32 %v2230, %v1968
        %v2232 = vmax.f32 %v2231, %v2032
        %v2233 = vmax.f32 %v2232, %v2096
        %v2234 = vmax.f32 %v2233, %v2160
        %v2235 = vmax.f32 %v1653, %v1717
        %v2236 = vmax.f32 %v2235, %v1781
        %v2237 = vmax.f32 %v2236, %v1845
        %v2238 = vmax.f32 %v2237, %v1909
        %v2239 = vmax.f32 %v2238, %v1973
        %v2240 = vmax.f32 %v2239, %v2037
        %v2241 = vmax.f32 %v2240, %v2101
        %v2242 = vmax.f32 %v2241, %v2165
        %v2243 = vmax.f32 %v1656, %v1720
        %v2244 = vmax.f32 %v2243, %v1784
        %v2245 = vmax.f32 %v2244, %v1848
        %v2246 = vmax.f32 %v2245, %v1912
        %v2247 = vmax.f32 %v2246, %v1976
        %v2248 = vmax.f32 %v2247, %v2040
        %v2249 = vmax.f32 %v2248, %v2104
        %v2250 = vmax.f32 %v2249, %v2168
        %v2251 = vmax.f32 %v1661, %v1725
        %v2252 = vmax.f32 %v2251, %v1789
        %v2253 = vmax.f32 %v2252, %v1853
        %v2254 = vmax.f32 %v2253, %v1917
        %v2255 = vmax.f32 %v2254, %v1981
        %v2256 = vmax.f32 %v2255, %v2045
        %v2257 = vmax.f32 %v2256, %v2109
        %v2258 = vmax.f32 %v2257, %v2173
        %v2259 = vmax.f32 %v1664, %v1728
        %v2260 = vmax.f32 %v2259, %v1792
        %v2261 = vmax.f32 %v2260, %v1856
        %v2262 = vmax.f32 %v2261, %v1920
        %v2263 = vmax.f32 %v2262, %v1984
        %v2264 = vmax.f32 %v2263, %v2048
        %v2265 = vmax.f32 %v2264, %v2112
        %v2266 = vmax.f32 %v2265, %v2176
        %v2267 = vmax.f32 %v1669, %v1733
        %v2268 = vmax.f32 %v2267, %v1797
        %v2269 = vmax.f32 %v2268, %v1861
        %v2270 = vmax.f32 %v2269, %v1925
        %v2271 = vmax.f32 %v2270, %v1989
        %v2272 = vmax.f32 %v2271, %v2053
        %v2273 = vmax.f32 %v2272, %v2117
        %v2274 = vmax.f32 %v2273, %v2181
        %v2275 = vmax.f32 %v1672, %v1736
        %v2276 = vmax.f32 %v2275, %v1800
        %v2277 = vmax.f32 %v2276, %v1864
        %v2278 = vmax.f32 %v2277, %v1928
        %v2279 = vmax.f32 %v2278, %v1992
        %v2280 = vmax.f32 %v2279, %v2056
        %v2281 = vmax.f32 %v2280, %v2120
        %v2282 = vmax.f32 %v2281, %v2184
        %v2283 = vmax.f32 %v1677, %v1741
        %v2284 = vmax.f32 %v2283, %v1805
        %v2285 = vmax.f32 %v2284, %v1869
        %v2286 = vmax.f32 %v2285, %v1933
        %v2287 = vmax.f32 %v2286, %v1997
        %v2288 = vmax.f32 %v2287, %v2061
        %v2289 = vmax.f32 %v2288, %v2125
        %v2290 = vmax.f32 %v2289, %v2189
        %v2291 = vmax.f32 %v1680, %v1744
        %v2292 = vmax.f32 %v2291, %v1808
        %v2293 = vmax.f32 %v2292, %v1872
        %v2294 = vmax.f32 %v2293, %v1936
        %v2295 = vmax.f32 %v2294, %v2000
        %v2296 = vmax.f32 %v2295, %v2064
        %v2297 = vmax.f32 %v2296, %v2128
        %v2298 = vmax.f32 %v2297, %v2192
        %v2299 = vmax.f32 %v1685, %v1749
        %v2300 = vmax.f32 %v2299, %v1813
        %v2301 = vmax.f32 %v2300, %v1877
        %v2302 = vmax.f32 %v2301, %v1941
        %v2303 = vmax.f32 %v2302, %v2005
        %v2304 = vmax.f32 %v2303, %v2069
        %v2305 = vmax.f32 %v2304, %v2133
        %v2306 = vmax.f32 %v2305, %v2197
        %v2307 = vmax.f32 %v1688, %v1752
        %v2308 = vmax.f32 %v2307, %v1816
        %v2309 = vmax.f32 %v2308, %v1880
        %v2310 = vmax.f32 %v2309, %v1944
        %v2311 = vmax.f32 %v2310, %v2008
        %v2312 = vmax.f32 %v2311, %v2072
        %v2313 = vmax.f32 %v2312, %v2136
        %v2314 = vmax.f32 %v2313, %v2200
        %v2315 = vmax.f32 %v1693, %v1757
        %v2316 = vmax.f32 %v2315, %v1821
        %v2317 = vmax.f32 %v2316, %v1885
        %v2318 = vmax.f32 %v2317, %v1949
        %v2319 = vmax.f32 %v2318, %v2013
        %v2320 = vmax.f32 %v2319, %v2077
        %v2321 = vmax.f32 %v2320, %v2141
        %v2322 = vmax.f32 %v2321, %v2205
        %v2323 = vmax.f32 %v1696, %v1760
        %v2324 = vmax.f32 %v2323, %v1824
        %v2325 = vmax.f32 %v2324, %v1888
        %v2326 = vmax.f32 %v2325, %v1952
        %v2327 = vmax.f32 %v2326, %v2016
        %v2328 = vmax.f32 %v2327, %v2080
        %v2329 = vmax.f32 %v2328, %v2144
        %v2330 = vmax.f32 %v2329, %v2208
        %v2331 = vmax.f32 %v1701, %v1765
        %v2332 = vmax.f32 %v2331, %v1829
        %v2333 = vmax.f32 %v2332, %v1893
        %v2334 = vmax.f32 %v2333, %v1957
        %v2335 = vmax.f32 %v2334, %v2021
        %v2336 = vmax.f32 %v2335, %v2085
        %v2337 = vmax.f32 %v2336, %v2149
        %v2338 = vmax.f32 %v2337, %v2213
        %v2339 = vmax.f32 %v1704, %v1768
        %v2340 = vmax.f32 %v2339, %v1832
        %v2341 = vmax.f32 %v2340, %v1896
        %v2342 = vmax.f32 %v2341, %v1960
        %v2343 = vmax.f32 %v2342, %v2024
        %v2344 = vmax.f32 %v2343, %v2088
        %v2345 = vmax.f32 %v2344, %v2152
        %v2346 = vmax.f32 %v2345, %v2216
        %v2363 = vunpack.c.l.b16 %v867
        %v2364 = vunpack.c.l.b16 %v868
        %v2365 = vunpack.c.l.b16 %v869
        %v2366 = vunpack.c.l.b16 %v870
        %v2367 = vunpack.c.l.b16 %v871
        %v2368 = vunpack.c.l.b16 %v872
        %v2369 = vunpack.c.l.b16 %v873
        %v2370 = vunpack.c.l.b16 %v874
        %v2371 = vunpack.c.l.b16 %v875
        %v2372 = vunpack.c.l.b16 %v876
        %v2373 = vunpack.c.l.b16 %v877
        %v2374 = vunpack.c.l.b16 %v878
        %v2375 = vunpack.c.l.b16 %v879
        %v2376 = vunpack.c.l.b16 %v880
        %v2377 = vunpack.c.l.b16 %v881
        %v2378 = vunpack.c.l.b16 %v882
        %v2379 = vpack.c.b16 %v2364, %v2363
        %v2380 = vpack.c.b16 %v2366, %v2365
        %v2381 = vpack.c.b16 %v2368, %v2367
        %v2382 = vpack.c.b16 %v2370, %v2369
        %v2383 = vpack.c.b16 %v2372, %v2371
        %v2384 = vpack.c.b16 %v2374, %v2373
        %v2385 = vpack.c.b16 %v2376, %v2375
        %v2386 = vpack.c.b16 %v2378, %v2377
        %v2388 = vsel %vm1389, %v2379, 0
        %v2391 = vsel %vm1389, %v2380, 0
        %v2394 = vsel %vm1389, %v2381, 0
        %v2397 = vsel %vm1389, %v2382, 0
        %v2400 = vsel %vm1389, %v2383, 0
        %v2403 = vsel %vm1389, %v2384, 0
        %v2406 = vsel %vm1389, %v2385, 0
        %v2409 = vsel %vm1389, %v2386, 0
        %v2412 = vsel %vm1606, %v883, 0
        %2414 = vmatprep.subr.bf16.mxu0 0
        %2415 = vmatpush1.bf16.msra.mxu0 %v2412
        %2416 = vmatprep.subr.bf16.mxu0 0
        %2417 = vmatpush1.bf16.msra.mxu0 0
        %2418 = vmatprep.subr.bf16.mxu0 0
        %2419 = vmatpush1.bf16.msra.mxu0 0
        %2420 = vmatprep.subr.bf16.mxu0 0
        %2421 = vmatpush1.bf16.msra.mxu0 0
        %2422 = vmatprep.subr.bf16.mxu0 0
        %2423 = vmatpush1.bf16.msra.mxu0 0
        %2424 = vmatprep.subr.bf16.mxu0 0
        %2425 = vmatpush1.bf16.msra.mxu0 0
        %2426 = vmatprep.subr.bf16.mxu0 0
        %2427 = vmatpush1.bf16.msra.mxu0 0
        %2428 = vmatprep.subr.bf16.mxu0 0
        %2429 = vmatpush1.bf16.msra.mxu0 0
        %2430 = vmatprep.subr.bf16.mxu0 0
        %2431 = vmatpush1.bf16.msra.mxu0 0
        %2432 = vmatprep.subr.bf16.mxu0 0
        %2433 = vmatpush1.bf16.msra.mxu0 0
        %2434 = vmatprep.subr.bf16.mxu0 0
        %2435 = vmatpush1.bf16.msra.mxu0 0
        %2436 = vmatprep.subr.bf16.mxu0 0
        %2437 = vmatpush1.bf16.msra.mxu0 0
        %2438 = vmatprep.subr.bf16.mxu0 0
        %2439 = vmatpush1.bf16.msra.mxu0 0
        %2440 = vmatprep.subr.bf16.mxu0 0
        %2441 = vmatpush1.bf16.msra.mxu0 0
        %2442 = vmatprep.subr.bf16.mxu0 0
        %2443 = vmatpush1.bf16.msra.mxu0 0
        %2444 = vmatprep.subr.bf16.mxu0 0
        %2445 = vmatpush1.bf16.msra.mxu0 0
        %2446 = vmatprep.mubr.bf16.mxu0 0
        %2447 = vmatmul.mubr.bf16.gmra.mrb[0].mxu0 %v2388
        %v2448 = vpop.f32.mrb[0].mxu0
        %v2449 = vadd.f32 %v2226, %v2448
        %v2450 = vpop.f32.mrb[0].mxu0
        %v2451 = vpop.f32.mrb[0].mxu0
        %v2452 = vadd.f32 %v2234, %v2451
        %v2453 = vpop.f32.mrb[0].mxu0
        %2454 = vmatprep.mubr.bf16.mxu0 0
        %2455 = vmatmul.mubr.bf16.gmra.mrb[0].mxu0 %v2391
        %v2456 = vpop.f32.mrb[0].mxu0
        %v2457 = vadd.f32 %v2242, %v2456
        %v2458 = vpop.f32.mrb[0].mxu0
        %v2459 = vpop.f32.mrb[0].mxu0
        %v2460 = vadd.f32 %v2250, %v2459
        %v2461 = vpop.f32.mrb[0].mxu0
        %2462 = vmatprep.mubr.bf16.mxu0 0
        %2463 = vmatmul.mubr.bf16.gmra.mrb[0].mxu0 %v2394
        %v2464 = vpop.f32.mrb[0].mxu0
        %v2465 = vadd.f32 %v2258, %v2464
        %v2466 = vpop.f32.mrb[0].mxu0
        %v2467 = vpop.f32.mrb[0].mxu0
        %v2468 = vadd.f32 %v2266, %v2467
        %v2469 = vpop.f32.mrb[0].mxu0
        %2470 = vmatprep.mubr.bf16.mxu0 0
        %2471 = vmatmul.mubr.bf16.gmra.mrb[0].mxu0 %v2397
        %v2472 = vpop.f32.mrb[0].mxu0
        %v2473 = vadd.f32 %v2274, %v2472
        %v2474 = vpop.f32.mrb[0].mxu0
        %v2475 = vpop.f32.mrb[0].mxu0
        %v2476 = vadd.f32 %v2282, %v2475
        %v2477 = vpop.f32.mrb[0].mxu0
        %2478 = vmatprep.mubr.bf16.mxu0 0
        %2479 = vmatmul.mubr.bf16.gmra.mrb[0].mxu0 %v2400
        %v2480 = vpop.f32.mrb[0].mxu0
        %v2481 = vadd.f32 %v2290, %v2480
        %v2482 = vpop.f32.mrb[0].mxu0
        %v2483 = vpop.f32.mrb[0].mxu0
        %v2484 = vadd.f32 %v2298, %v2483
        %v2485 = vpop.f32.mrb[0].mxu0
        %2486 = vmatprep.mubr.bf16.mxu0 0
        %2487 = vmatmul.mubr.bf16.gmra.mrb[0].mxu0 %v2403
        %v2488 = vpop.f32.mrb[0].mxu0
        %v2489 = vadd.f32 %v2306, %v2488
        %v2490 = vpop.f32.mrb[0].mxu0
        %v2491 = vpop.f32.mrb[0].mxu0
        %v2492 = vadd.f32 %v2314, %v2491
        %v2493 = vpop.f32.mrb[0].mxu0
        %2494 = vmatprep.mubr.bf16.mxu0 0
        %2495 = vmatmul.mubr.bf16.gmra.mrb[0].mxu0 %v2406
        %v2496 = vpop.f32.mrb[0].mxu0
        %v2497 = vadd.f32 %v2322, %v2496
        %v2498 = vpop.f32.mrb[0].mxu0
        %v2499 = vpop.f32.mrb[0].mxu0
        %v2500 = vadd.f32 %v2330, %v2499
        %v2501 = vpop.f32.mrb[0].mxu0
        %2502 = vmatprep.mubr.bf16.mxu0 0
        %2503 = vmatmul.mubr.bf16.gmra.mrb[0].mxu0 %v2409
        %v2504 = vpop.f32.mrb[0].mxu0
        %v2505 = vadd.f32 %v2338, %v2504
        %v2506 = vpop.f32.mrb[0].mxu0
        %v2507 = vpop.f32.mrb[0].mxu0
        %v2508 = vadd.f32 %v2346, %v2507
        %v2509 = vpop.f32.mrb[0].mxu0
        %2510 = vdwg.mxu0
        %v2511 = vmax.f32 %v2449, 0.0
        %v2512 = vmax.f32 %v2452, 0.0
        %v2513 = vmax.f32 %v2457, 0.0
        %v2514 = vmax.f32 %v2460, 0.0
        %v2515 = vmax.f32 %v2465, 0.0
        %v2516 = vmax.f32 %v2468, 0.0
        %v2517 = vmax.f32 %v2473, 0.0
        %v2518 = vmax.f32 %v2476, 0.0
        %v2519 = vmax.f32 %v2481, 0.0
        %v2520 = vmax.f32 %v2484, 0.0
        %v2521 = vmax.f32 %v2489, 0.0
        %v2522 = vmax.f32 %v2492, 0.0
        %v2523 = vmax.f32 %v2497, 0.0
        %v2524 = vmax.f32 %v2500, 0.0
        %v2525 = vmax.f32 %v2505, 0.0
        %v2526 = vmax.f32 %v2508, 0.0
        %2527 = vst [vmem:[%s853] sm:$0xff] %v2511
        %2528 = vst [vmem:[%s853 + $0x8] sm:$0xff] %v2512
        %2529 = vst [vmem:[%s853 + $0x10] sm:$0xff] %v2513
        %2530 = vst [vmem:[%s853 + $0x18] sm:$0xff] %v2514
        %2531 = vst [vmem:[%s853 + $0x20] sm:$0xff] %v2515
        %2532 = vst [vmem:[%s853 + $0x28] sm:$0xff] %v2516
        %2533 = vst [vmem:[%s853 + $0x30] sm:$0xff] %v2517
        %2534 = vst [vmem:[%s853 + $0x38] sm:$0xff] %v2518
        %2535 = vst [vmem:[%s853 + $0x40] sm:$0xff] %v2519
        %2536 = vst [vmem:[%s853 + $0x48] sm:$0xff] %v2520
        %2537 = vst [vmem:[%s853 + $0x50] sm:$0xff] %v2521
        %2538 = vst [vmem:[%s853 + $0x58] sm:$0xff] %v2522
        %2539 = vst [vmem:[%s853 + $0x60] sm:$0xff] %v2523
        %2540 = vst [vmem:[%s853 + $0x68] sm:$0xff] %v2524
        %2541 = vst [vmem:[%s853 + $0x70] sm:$0xff] %v2525
        %2542 = vst [vmem:[%s853 + $0x78] sm:$0xff] %v2526
        %s2543 = sand.u32 %s138, 1
        %s2544 = scalar_lea.sflag [#allocation4], %s2543
        %s2545 = sand.u32 %s138, 1
        %s2546 = smul.addr %s2545, 128
        %s2547 = scalar_lea.vmem [#allocation3], %s2546
        // Predicated region
        $region78: #{tpu_custom_call.1} parent=72 // pred_check
          %p2548 = pneg %p148
        $region79: #{tpu_custom_call.1} parent=72 // pred_check_branch
          %2550 = sbr.rel (%p2548) target = $region81
        $region80: #{tpu_custom_call.1} parent=72 // pred_region
          %s2551 = smul.u32 16, %s23
          %s2553 = ssub.s32 2048, 2048
          %2554 = vsyncadd %s2544, %s2553
          %s2555 = smul.addr %s22, 32
          %s2556 = sadd.s32 %s2551, %s2555
          %s2557 = smul.addr %s2556, 128
          %s2558 = scalar_lea.hbm %s4, %s2557
          %s2559 = sshll.u32 %s2547, 4
          %s2560 = int_to_ptr.vmem [resolvable:$true] %s2559
          %2565 = dma.vmem_to_hbm [thread:$0]  %s2560, 2048, %s2558, %s2544, 128, 128, 8
        $region81: #{tpu_custom_call.1} parent=72 // pred_fallthru
          _
      $region73: #{tpu_custom_call.1} parent=5 // pred_fallthru
        _
      %p2566 = scmp.le.s32.totalorder 2, %s13
      // Predicated region
      $region82: #{tpu_custom_call.1} parent=5 // pred_check
        %p2567 = pneg %p2566
      $region83: #{tpu_custom_call.1} parent=5 // pred_check_branch
        %2569 = sbr.rel (%p2567) target = $region85
      $region84: #{tpu_custom_call.1} parent=5 // pred_region
        %s2570 = ssub.s32 %s13, 2
        // Predicated region
        $region86: #{tpu_custom_call.1} parent=84 // pred_check
          %p2571 = pneg %p154
        $region87: #{tpu_custom_call.1} parent=84 // pred_check_branch
          %2573 = sbr.rel (%p2571) target = $region89
        $region88: #{tpu_custom_call.1} parent=84 // pred_region
          %s2574 = sand.u32 %s139, 1
          %s2575 = scalar_lea.sflag [#allocation4], %s2574
          %s2576 = sand.u32 %s139, 1
          %s2577 = smul.addr %s2576, 128
          %s2578 = scalar_lea.vmem [#allocation3], %s2577
          %2579 = dma.done %s2575, 2048
        $region89: #{tpu_custom_call.1} parent=84 // pred_fallthru
          _
      $region85: #{tpu_custom_call.1} parent=5 // pred_fallthru
        _
    $region6: #{tpu_custom_call.1} parent=1 // loop_footer
      %s17 = sadd.s32 1, %s13
    $region7: #{tpu_custom_call.1} parent=1 // loop_footer_branch
      %12 = sbr.rel target = $region3
    $region8: #{tpu_custom_call.1} parent=1 // loop_exit
      _
    %2580 = vsyncpa [#allocation4], 1
    %s2581 = scalar_lea.sflag [#allocation4], 1
    %2582 = vsyncpa %s2581, 1

</llo_original>
